<compile_context>
chip_gen: v6e
topology: v6e:2x2x1
jax: 0.10.0
libtpu: 0.0.40
codegen_flags: <defaults>
</compile_context>

<pallas_src>
import functools

import jax
import jax.numpy as jnp
from jax.experimental import pallas as pl
from jax.experimental.pallas import tpu as pltpu


def _round_up(x, m):
    return (x + m - 1) // m * m


def _gru_recurrence_kernel(xp_ref, h0_ref, whzr_ref, whh_ref,   # inputs
                           hall_ref,                            # output
                           h_scr,                               # scratch
                           *, tc, hp, unroll, w_dtype):
    """One grid step = `tc` GRU timesteps on one padded (Bb, Hp) batch block.

    Grid is (batch_blocks, time_chunks); time is the inner ("arbitrary") axis.

    xp_ref  : (tc, Bb, 3*Hp)  precomputed  X@[Wxz|Wxr|Wxh] + [bz|br|bh]  (w_dtype)
    h0_ref  : (Bb, Hp)        initial hidden state                       (f32)
    whzr_ref: (Hp, 2*Hp)      fused [Whz | Whr]                          (w_dtype)
    whh_ref : (Hp, Hp)                                                   (w_dtype)
    hall_ref: (tc, Bb, Hp)    H_t for every step in this chunk           (f32)
    h_scr   : (Bb, Hp)        hidden state carried across time chunks    (f32)
    """
    @pl.when(pl.program_id(1) == 0)
    def _():
        h_scr[...] = h0_ref[...]

    def step(t, h):
        # Read refs inside the body: live ranges are per-iteration, the LLO
        # scheduler / regalloc are free to keep or reload them.
        xp = xp_ref[t].astype(jnp.float32)                       # (Bb, 3*Hp)
        zr = jax.nn.sigmoid(
            xp[:, :2 * hp]
            + jnp.dot(h.astype(w_dtype), whzr_ref[...],
                      preferred_element_type=jnp.float32))
        z = zr[:, :hp]
        r = zr[:, hp:]
        h_tilde = jnp.tanh(
            xp[:, 2 * hp:]
            + jnp.dot((r * h).astype(w_dtype), whh_ref[...],
                      preferred_element_type=jnp.float32))
        h_new = h_tilde + z * (h - h_tilde)                      # == z*h + (1-z)*h_tilde
        hall_ref[t] = h_new
        return h_new

    h_scr[...] = jax.lax.fori_loop(0, tc, step, h_scr[...], unroll=unroll)


def gru_forward(x_idx, state, params, num_inputs, num_hiddens, num_outputs,
                time_chunk=64, batch_blocks=1, param_dtype=jnp.bfloat16):
    """x_idx: (B, T) int32; state: (B, H) f32 or None. Returns (result, new_state).

    batch_blocks: set to 2 on v7x (2 TensorCores) when the batch is large enough
    that each block still has >= 8 rows; leave at 1 on v5e/v6e.
    """
    B, T = x_idx.shape
    if state is None:
        state = jnp.zeros((B, num_hiddens), dtype=jnp.float32)

    wxz, whz, bz, wxr, whr, br, wxh, whh, bh, whq, bq = params

    Bb = _round_up(-(-B // batch_blocks), 8)   # rows per batch block (sublane tile)
    Bp = Bb * batch_blocks
    Hp = _round_up(num_hiddens, 128)           # lane tile
    tc = min(time_chunk, T)                    # timesteps per grid step
    Tp = _round_up(T, tc)
    unroll = max(1, min(8, tc))                # decouple unroll from DMA chunk size

    # ---- hoisted input projection (XLA gather, not a kernel) -------------
    pad_cols = lambda w: jnp.pad(w, ((0, 0), (0, Hp - num_hiddens)))
    wx3 = jnp.concatenate([pad_cols(wxz), pad_cols(wxr), pad_cols(wxh)], axis=1)  # (I, 3Hp)
    b3 = jnp.concatenate([pad_cols(bz), pad_cols(br), pad_cols(bh)], axis=1)      # (1, 3Hp)
    xp = (wx3[x_idx.T] + b3).astype(param_dtype)            # (T, B, 3Hp): one-hot @ W == row gather
    xp = jnp.pad(xp, ((0, Tp - T), (0, Bp - B), (0, 0)))

    # ---- fused / padded hidden-side weights (bf16) ------------------------
    pad_hh = lambda w: jnp.pad(w, ((0, Hp - num_hiddens), (0, Hp - num_hiddens)))
    whzr_p = jnp.concatenate([pad_hh(whz), pad_hh(whr)], axis=1).astype(param_dtype)  # (Hp, 2Hp)
    whh_p = pad_hh(whh).astype(param_dtype)                                           # (Hp, Hp)

    h0 = jnp.pad(state.astype(jnp.float32),
                 ((0, Bp - B), (0, Hp - num_hiddens)))

    # ---- VMEM budget: derive from the per-chunk footprint, cap for v7x ----
    wbytes = jnp.dtype(param_dtype).itemsize
    per_chunk = (2 * tc * Bb * 3 * Hp * wbytes          # xp chunk, double-buffered
                 + 2 * tc * Bb * Hp * 4                 # hall chunk, double-buffered
                 + 2 * (Hp * 2 * Hp + Hp * Hp) * wbytes  # weights (double-buffered)
                 + 3 * Bb * Hp * 4)                     # h0 (x2) + scratch
    vmem_limit = int(min(max(32 * 1024 * 1024, 2 * per_chunk), 48 * 1024 * 1024))

    kernel = functools.partial(_gru_recurrence_kernel,
                               tc=tc, hp=Hp, unroll=unroll, w_dtype=param_dtype)

    h_all = pl.pallas_call(
        kernel,
        out_shape=jax.ShapeDtypeStruct((Tp, Bp, Hp), jnp.float32),
        grid_spec=pltpu.PrefetchScalarGridSpec(
            num_scalar_prefetch=0,
            grid=(batch_blocks, Tp // tc),
            in_specs=[
                pl.BlockSpec((tc, Bb, 3 * Hp), lambda b, c: (c, b, 0)),  # xp chunk
                pl.BlockSpec((Bb, Hp), lambda b, c: (b, 0)),             # h0
                pl.BlockSpec((Hp, 2 * Hp), lambda b, c: (0, 0)),         # [Whz|Whr]
                pl.BlockSpec((Hp, Hp), lambda b, c: (0, 0)),             # Whh
            ],
            out_specs=pl.BlockSpec((tc, Bb, Hp), lambda b, c: (c, b, 0)),
            scratch_shapes=[pltpu.VMEM((Bb, Hp), jnp.float32)],
        ),
        compiler_params=pltpu.CompilerParams(
            # batch blocks are independent (megacore-shardable on v7x);
            # the time axis is a sequential recurrence.
            dimension_semantics=("parallel", "arbitrary"),
            vmem_limit_bytes=vmem_limit),
    )(xp, h0, whzr_p, whh_p)

    # ---- hoisted output projection on padded lanes (one lane-dense matmul) ----
    whq_p = jnp.pad(whq, ((0, Hp - num_hiddens), (0, 0)))   # (Hp, O), padded rows hit zero lanes
    h_seq = h_all[:T, :B]                                    # (T, B, Hp): only time/batch slices
    new_state = h_seq[T - 1, :, :num_hiddens]                # final hidden state (B, H)
    result = h_seq.reshape(T * B, Hp) @ whq_p + bq           # (T*B, O), same order as torch.cat(dim=0)
    return result, new_state


def init_params(key, num_inputs, num_hiddens, num_outputs):
    ks = jax.random.split(key, 7)
    scale = 0.01
    wxz = scale * jax.random.normal(ks[0], (num_inputs, num_hiddens), jnp.float32)
    whz = scale * jax.random.normal(ks[1], (num_hiddens, num_hiddens), jnp.float32)
    bz = jnp.zeros((1, num_hiddens), jnp.float32)
    wxr = scale * jax.random.normal(ks[2], (num_inputs, num_hiddens), jnp.float32)
    whr = scale * jax.random.normal(ks[3], (num_hiddens, num_hiddens), jnp.float32)
    br = jnp.zeros((1, num_hiddens), jnp.float32)
    wxh = scale * jax.random.normal(ks[4], (num_inputs, num_hiddens), jnp.float32)
    whh = scale * jax.random.normal(ks[5], (num_hiddens, num_hiddens), jnp.float32)
    bh = jnp.zeros((1, num_hiddens), jnp.float32)
    whq = scale * jax.random.normal(ks[6], (num_hiddens, num_outputs), jnp.float32)
    bq = jnp.zeros((1, num_outputs), jnp.float32)
    return (wxz, whz, bz, wxr, whr, br, wxh, whh, bh, whq, bq)


def gru_reference(x_idx, state, params, num_inputs):
    """Pure-JAX f32 reference of the same recurrence (PyTorch semantics)."""
    wxz, whz, bz, wxr, whr, br, wxh, whh, bh, whq, bq = params
    B, T = x_idx.shape
    h = state
    ys = []
    for t in range(T):
        x = jax.nn.one_hot(x_idx[:, t], num_inputs, dtype=jnp.float32)
        z = jax.nn.sigmoid(x @ wxz + h @ whz + bz)
        r = jax.nn.sigmoid(x @ wxr + h @ whr + br)
        ht = jnp.tanh(x @ wxh + (r * h) @ whh + bh)
        h = z * h + (1.0 - z) * ht
        ys.append(h @ whq + bq)
    return jnp.concatenate(ys, axis=0), h


if __name__ == "__main__":
    # GatedRecurrentUnit(inputs=vocab, hiddens, outputs=vocab)
    batch, seq = 2, 8
    num_inputs, num_hiddens, num_outputs = 32, 32, 32

    key = jax.random.PRNGKey(0)
    kparam, kx = jax.random.split(key)
    params = init_params(kparam, num_inputs, num_hiddens, num_outputs)

    x_idx = jax.random.randint(kx, (batch, seq), 0, num_inputs, dtype=jnp.int32)
    state0 = jnp.zeros((batch, num_hiddens), jnp.float32)

    result, new_state = gru_forward(x_idx, state0, params,
                                    num_inputs, num_hiddens, num_outputs)
    jax.block_until_ready((result, new_state))

    ref_result, ref_state = gru_reference(x_idx, state0, params, num_inputs)
    assert result.shape == (seq * batch, num_outputs)
    assert new_state.shape == (batch, num_hiddens)
    # bf16 weights / xp (f32 state & activations) -> slightly looser tolerance.
    assert jnp.allclose(result, ref_result, atol=2e-3)
    assert jnp.allclose(new_state, ref_state, atol=2e-3)

    print("KERNEL_OK")
</pallas_src>

<mosaic_0001>
module attributes {stable_mosaic.version = 11 : i64} {
  func.func @_gru_recurrence_kernel(%arg0: i32, %arg1: i32, %arg2: memref<8x8x384xbf16, #tpu.memory_space<vmem>>, %arg3: memref<8x128xf32, #tpu.memory_space<vmem>>, %arg4: memref<128x256xbf16, #tpu.memory_space<vmem>>, %arg5: memref<128x128xbf16, #tpu.memory_space<vmem>>, %arg6: memref<8x8x128xf32, #tpu.memory_space<vmem>>, %arg7: memref<8x128xf32, #tpu.memory_space<vmem>>) attributes {dimension_semantics = [#tpu.dimension_semantics<parallel>, #tpu.dimension_semantics<arbitrary>], iteration_bounds = array<i64: 1, 1>, scalar_prefetch = 0 : i64, scratch_operands = 1 : i64, tpu.core_type = #tpu.core_type<tc>, window_params = [{transform_indices = @transform_0, window_bounds = array<i64: 8, 8, 384>}, {transform_indices = @transform_1, window_bounds = array<i64: 8, 128>}, {pipeline_mode = #tpu.pipeline_mode<synchronous>, transform_indices = @transform_2, window_bounds = array<i64: 128, 256>}, {pipeline_mode = #tpu.pipeline_mode<synchronous>, transform_indices = @transform_3, window_bounds = array<i64: 128, 128>}, {transform_indices = @transform_4, window_bounds = array<i64: 8, 8, 128>}]} {
    %c0_i32 = arith.constant 0 : i32
    %0 = arith.cmpi eq, %arg1, %c0_i32 : i32
    %1 = arith.extui %0 : i1 to i32
    %c0_i32_0 = arith.constant 0 : i32
    %2 = arith.cmpi ne, %1, %c0_i32_0 : i32
    scf.if %2 {
      %c0_92 = arith.constant 0 : index
      %c0_93 = arith.constant 0 : index
      %245 = vector.load %arg3[%c0_92, %c0_93] : memref<8x128xf32, #tpu.memory_space<vmem>>, vector<8x128xf32>
      %c0_94 = arith.constant 0 : index
      %c0_95 = arith.constant 0 : index
      %246 = vector.load %arg7[%c0_94, %c0_95] : memref<8x128xf32, #tpu.memory_space<vmem>>, vector<8x128xf32>
      tpu.vector_store %arg7[%c0_94, %c0_95], %245 {strides = array<i32>} : memref<8x128xf32, #tpu.memory_space<vmem>>, vector<8x128xf32>,
    } else {
    }
    %c0 = arith.constant 0 : index
    %c0_1 = arith.constant 0 : index
    %3 = vector.load %arg7[%c0, %c0_1] : memref<8x128xf32, #tpu.memory_space<vmem>>, vector<8x128xf32>
    %c0_i32_2 = arith.constant 0 : i32
    %4 = arith.index_cast %c0_i32_2 : i32 to index
    %c0_3 = arith.constant 0 : index
    %c0_4 = arith.constant 0 : index
    %5 = vector.load %arg2[%4, %c0_3, %c0_4] : memref<8x8x384xbf16, #tpu.memory_space<vmem>>, vector<1x8x384xbf16>
    %6 = vector.shape_cast %5 : vector<1x8x384xbf16> to vector<8x384xbf16>
    %7 = arith.extf %6 : vector<8x384xbf16> to vector<8x384xf32>
    %8 = vector.extract_strided_slice %7 {offsets = [0, 0], sizes = [8, 256], strides = [1, 1]} : vector<8x384xf32> to vector<8x256xf32>
    %9 = arith.truncf %3 : vector<8x128xf32> to vector<8x128xbf16>
    %c0_5 = arith.constant 0 : index
    %c0_6 = arith.constant 0 : index
    %10 = vector.load %arg4[%c0_5, %c0_6] : memref<128x256xbf16, #tpu.memory_space<vmem>>, vector<128x256xbf16>
    %cst = arith.constant dense<0.000000e+00> : vector<8x256xf32>
    %11 = tpu.matmul %9, %10, %cst {dimension_numbers = #tpu.dot_dimension_numbers<[1], [0], [0], [1], [0, 0, 1, 1], [], []>} : vector<8x128xbf16>, vector<128x256xbf16>, vector<8x256xf32> -> vector<8x256xf32>
    %12 = arith.addf %8, %11 : vector<8x256xf32>
    %13 = arith.negf %12 : vector<8x256xf32>
    %14 = math.exp %13 : vector<8x256xf32>
    %cst_7 = arith.constant 1.000000e+00 : f32
    %15 = vector.broadcast %cst_7 : f32 to vector<8x256xf32>
    %16 = arith.addf %15, %14 : vector<8x256xf32>
    %17 = arith.divf %15, %16 : vector<8x256xf32>
    %18 = vector.extract_strided_slice %17 {offsets = [0, 0], sizes = [8, 128], strides = [1, 1]} : vector<8x256xf32> to vector<8x128xf32>
    %19 = vector.extract_strided_slice %17 {offsets = [0, 128], sizes = [8, 128], strides = [1, 1]} : vector<8x256xf32> to vector<8x128xf32>
    %20 = vector.extract_strided_slice %7 {offsets = [0, 256], sizes = [8, 128], strides = [1, 1]} : vector<8x384xf32> to vector<8x128xf32>
    %21 = arith.mulf %19, %3 : vector<8x128xf32>
    %22 = arith.truncf %21 : vector<8x128xf32> to vector<8x128xbf16>
    %c0_8 = arith.constant 0 : index
    %c0_9 = arith.constant 0 : index
    %23 = vector.load %arg5[%c0_8, %c0_9] : memref<128x128xbf16, #tpu.memory_space<vmem>>, vector<128x128xbf16>
    %cst_10 = arith.constant dense<0.000000e+00> : vector<8x128xf32>
    %24 = tpu.matmul %22, %23, %cst_10 {dimension_numbers = #tpu.dot_dimension_numbers<[1], [0], [0], [1], [0, 0, 1, 1], [], []>} : vector<8x128xbf16>, vector<128x128xbf16>, vector<8x128xf32> -> vector<8x128xf32>
    %25 = arith.addf %20, %24 : vector<8x128xf32>
    %26 = math.tanh %25 : vector<8x128xf32>
    %27 = arith.subf %3, %26 : vector<8x128xf32>
    %28 = arith.mulf %18, %27 : vector<8x128xf32>
    %29 = arith.addf %26, %28 : vector<8x128xf32>
    %30 = arith.index_cast %c0_i32_2 : i32 to index
    %c0_11 = arith.constant 0 : index
    %c0_12 = arith.constant 0 : index
    %31 = vector.load %arg6[%30, %c0_11, %c0_12] : memref<8x8x128xf32, #tpu.memory_space<vmem>>, vector<1x8x128xf32>
    %32 = vector.shape_cast %31 : vector<1x8x128xf32> to vector<8x128xf32>
    %33 = vector.shape_cast %29 : vector<8x128xf32> to vector<1x8x128xf32>
    tpu.vector_store %arg6[%30, %c0_11, %c0_12], %33 {strides = array<i32>} : memref<8x8x128xf32, #tpu.memory_space<vmem>>, vector<1x8x128xf32>,
    %c1_i32 = arith.constant 1 : i32
    %34 = arith.index_cast %c1_i32 : i32 to index
    %c0_13 = arith.constant 0 : index
    %c0_14 = arith.constant 0 : index
    %35 = vector.load %arg2[%34, %c0_13, %c0_14] : memref<8x8x384xbf16, #tpu.memory_space<vmem>>, vector<1x8x384xbf16>
    %36 = vector.shape_cast %35 : vector<1x8x384xbf16> to vector<8x384xbf16>
    %37 = arith.extf %36 : vector<8x384xbf16> to vector<8x384xf32>
    %38 = vector.extract_strided_slice %37 {offsets = [0, 0], sizes = [8, 256], strides = [1, 1]} : vector<8x384xf32> to vector<8x256xf32>
    %39 = arith.truncf %29 : vector<8x128xf32> to vector<8x128xbf16>
    %c0_15 = arith.constant 0 : index
    %c0_16 = arith.constant 0 : index
    %40 = vector.load %arg4[%c0_15, %c0_16] : memref<128x256xbf16, #tpu.memory_space<vmem>>, vector<128x256xbf16>
    %cst_17 = arith.constant dense<0.000000e+00> : vector<8x256xf32>
    %41 = tpu.matmul %39, %40, %cst_17 {dimension_numbers = #tpu.dot_dimension_numbers<[1], [0], [0], [1], [0, 0, 1, 1], [], []>} : vector<8x128xbf16>, vector<128x256xbf16>, vector<8x256xf32> -> vector<8x256xf32>
    %42 = arith.addf %38, %41 : vector<8x256xf32>
    %43 = arith.negf %42 : vector<8x256xf32>
    %44 = math.exp %43 : vector<8x256xf32>
    %cst_18 = arith.constant 1.000000e+00 : f32
    %45 = vector.broadcast %cst_18 : f32 to vector<8x256xf32>
    %46 = arith.addf %45, %44 : vector<8x256xf32>
    %47 = arith.divf %45, %46 : vector<8x256xf32>
    %48 = vector.extract_strided_slice %47 {offsets = [0, 0], sizes = [8, 128], strides = [1, 1]} : vector<8x256xf32> to vector<8x128xf32>
    %49 = vector.extract_strided_slice %47 {offsets = [0, 128], sizes = [8, 128], strides = [1, 1]} : vector<8x256xf32> to vector<8x128xf32>
    %50 = vector.extract_strided_slice %37 {offsets = [0, 256], sizes = [8, 128], strides = [1, 1]} : vector<8x384xf32> to vector<8x128xf32>
    %51 = arith.mulf %49, %29 : vector<8x128xf32>
    %52 = arith.truncf %51 : vector<8x128xf32> to vector<8x128xbf16>
    %c0_19 = arith.constant 0 : index
    %c0_20 = arith.constant 0 : index
    %53 = vector.load %arg5[%c0_19, %c0_20] : memref<128x128xbf16, #tpu.memory_space<vmem>>, vector<128x128xbf16>
    %cst_21 = arith.constant dense<0.000000e+00> : vector<8x128xf32>
    %54 = tpu.matmul %52, %53, %cst_21 {dimension_numbers = #tpu.dot_dimension_numbers<[1], [0], [0], [1], [0, 0, 1, 1], [], []>} : vector<8x128xbf16>, vector<128x128xbf16>, vector<8x128xf32> -> vector<8x128xf32>
    %55 = arith.addf %50, %54 : vector<8x128xf32>
    %56 = math.tanh %55 : vector<8x128xf32>
    %57 = arith.subf %29, %56 : vector<8x128xf32>
    %58 = arith.mulf %48, %57 : vector<8x128xf32>
    %59 = arith.addf %56, %58 : vector<8x128xf32>
    %60 = arith.index_cast %c1_i32 : i32 to index
    %c0_22 = arith.constant 0 : index
    %c0_23 = arith.constant 0 : index
    %61 = vector.load %arg6[%60, %c0_22, %c0_23] : memref<8x8x128xf32, #tpu.memory_space<vmem>>, vector<1x8x128xf32>
    %62 = vector.shape_cast %61 : vector<1x8x128xf32> to vector<8x128xf32>
    %63 = vector.shape_cast %59 : vector<8x128xf32> to vector<1x8x128xf32>
    tpu.vector_store %arg6[%60, %c0_22, %c0_23], %63 {strides = array<i32>} : memref<8x8x128xf32, #tpu.memory_space<vmem>>, vector<1x8x128xf32>,
    %c2_i32 = arith.constant 2 : i32
    %64 = arith.index_cast %c2_i32 : i32 to index
    %c0_24 = arith.constant 0 : index
    %c0_25 = arith.constant 0 : index
    %65 = vector.load %arg2[%64, %c0_24, %c0_25] : memref<8x8x384xbf16, #tpu.memory_space<vmem>>, vector<1x8x384xbf16>
    %66 = vector.shape_cast %65 : vector<1x8x384xbf16> to vector<8x384xbf16>
    %67 = arith.extf %66 : vector<8x384xbf16> to vector<8x384xf32>
    %68 = vector.extract_strided_slice %67 {offsets = [0, 0], sizes = [8, 256], strides = [1, 1]} : vector<8x384xf32> to vector<8x256xf32>
    %69 = arith.truncf %59 : vector<8x128xf32> to vector<8x128xbf16>
    %c0_26 = arith.constant 0 : index
    %c0_27 = arith.constant 0 : index
    %70 = vector.load %arg4[%c0_26, %c0_27] : memref<128x256xbf16, #tpu.memory_space<vmem>>, vector<128x256xbf16>
    %cst_28 = arith.constant dense<0.000000e+00> : vector<8x256xf32>
    %71 = tpu.matmul %69, %70, %cst_28 {dimension_numbers = #tpu.dot_dimension_numbers<[1], [0], [0], [1], [0, 0, 1, 1], [], []>} : vector<8x128xbf16>, vector<128x256xbf16>, vector<8x256xf32> -> vector<8x256xf32>
    %72 = arith.addf %68, %71 : vector<8x256xf32>
    %73 = arith.negf %72 : vector<8x256xf32>
    %74 = math.exp %73 : vector<8x256xf32>
    %cst_29 = arith.constant 1.000000e+00 : f32
    %75 = vector.broadcast %cst_29 : f32 to vector<8x256xf32>
    %76 = arith.addf %75, %74 : vector<8x256xf32>
    %77 = arith.divf %75, %76 : vector<8x256xf32>
    %78 = vector.extract_strided_slice %77 {offsets = [0, 0], sizes = [8, 128], strides = [1, 1]} : vector<8x256xf32> to vector<8x128xf32>
    %79 = vector.extract_strided_slice %77 {offsets = [0, 128], sizes = [8, 128], strides = [1, 1]} : vector<8x256xf32> to vector<8x128xf32>
    %80 = vector.extract_strided_slice %67 {offsets = [0, 256], sizes = [8, 128], strides = [1, 1]} : vector<8x384xf32> to vector<8x128xf32>
    %81 = arith.mulf %79, %59 : vector<8x128xf32>
    %82 = arith.truncf %81 : vector<8x128xf32> to vector<8x128xbf16>
    %c0_30 = arith.constant 0 : index
    %c0_31 = arith.constant 0 : index
    %83 = vector.load %arg5[%c0_30, %c0_31] : memref<128x128xbf16, #tpu.memory_space<vmem>>, vector<128x128xbf16>
    %cst_32 = arith.constant dense<0.000000e+00> : vector<8x128xf32>
    %84 = tpu.matmul %82, %83, %cst_32 {dimension_numbers = #tpu.dot_dimension_numbers<[1], [0], [0], [1], [0, 0, 1, 1], [], []>} : vector<8x128xbf16>, vector<128x128xbf16>, vector<8x128xf32> -> vector<8x128xf32>
    %85 = arith.addf %80, %84 : vector<8x128xf32>
    %86 = math.tanh %85 : vector<8x128xf32>
    %87 = arith.subf %59, %86 : vector<8x128xf32>
    %88 = arith.mulf %78, %87 : vector<8x128xf32>
    %89 = arith.addf %86, %88 : vector<8x128xf32>
    %90 = arith.index_cast %c2_i32 : i32 to index
    %c0_33 = arith.constant 0 : index
    %c0_34 = arith.constant 0 : index
    %91 = vector.load %arg6[%90, %c0_33, %c0_34] : memref<8x8x128xf32, #tpu.memory_space<vmem>>, vector<1x8x128xf32>
    %92 = vector.shape_cast %91 : vector<1x8x128xf32> to vector<8x128xf32>
    %93 = vector.shape_cast %89 : vector<8x128xf32> to vector<1x8x128xf32>
    tpu.vector_store %arg6[%90, %c0_33, %c0_34], %93 {strides = array<i32>} : memref<8x8x128xf32, #tpu.memory_space<vmem>>, vector<1x8x128xf32>,
    %c3_i32 = arith.constant 3 : i32
    %94 = arith.index_cast %c3_i32 : i32 to index
    %c0_35 = arith.constant 0 : index
    %c0_36 = arith.constant 0 : index
    %95 = vector.load %arg2[%94, %c0_35, %c0_36] : memref<8x8x384xbf16, #tpu.memory_space<vmem>>, vector<1x8x384xbf16>
    %96 = vector.shape_cast %95 : vector<1x8x384xbf16> to vector<8x384xbf16>
    %97 = arith.extf %96 : vector<8x384xbf16> to vector<8x384xf32>
    %98 = vector.extract_strided_slice %97 {offsets = [0, 0], sizes = [8, 256], strides = [1, 1]} : vector<8x384xf32> to vector<8x256xf32>
    %99 = arith.truncf %89 : vector<8x128xf32> to vector<8x128xbf16>
    %c0_37 = arith.constant 0 : index
    %c0_38 = arith.constant 0 : index
    %100 = vector.load %arg4[%c0_37, %c0_38] : memref<128x256xbf16, #tpu.memory_space<vmem>>, vector<128x256xbf16>
    %cst_39 = arith.constant dense<0.000000e+00> : vector<8x256xf32>
    %101 = tpu.matmul %99, %100, %cst_39 {dimension_numbers = #tpu.dot_dimension_numbers<[1], [0], [0], [1], [0, 0, 1, 1], [], []>} : vector<8x128xbf16>, vector<128x256xbf16>, vector<8x256xf32> -> vector<8x256xf32>
    %102 = arith.addf %98, %101 : vector<8x256xf32>
    %103 = arith.negf %102 : vector<8x256xf32>
    %104 = math.exp %103 : vector<8x256xf32>
    %cst_40 = arith.constant 1.000000e+00 : f32
    %105 = vector.broadcast %cst_40 : f32 to vector<8x256xf32>
    %106 = arith.addf %105, %104 : vector<8x256xf32>
    %107 = arith.divf %105, %106 : vector<8x256xf32>
    %108 = vector.extract_strided_slice %107 {offsets = [0, 0], sizes = [8, 128], strides = [1, 1]} : vector<8x256xf32> to vector<8x128xf32>
    %109 = vector.extract_strided_slice %107 {offsets = [0, 128], sizes = [8, 128], strides = [1, 1]} : vector<8x256xf32> to vector<8x128xf32>
    %110 = vector.extract_strided_slice %97 {offsets = [0, 256], sizes = [8, 128], strides = [1, 1]} : vector<8x384xf32> to vector<8x128xf32>
    %111 = arith.mulf %109, %89 : vector<8x128xf32>
    %112 = arith.truncf %111 : vector<8x128xf32> to vector<8x128xbf16>
    %c0_41 = arith.constant 0 : index
    %c0_42 = arith.constant 0 : index
    %113 = vector.load %arg5[%c0_41, %c0_42] : memref<128x128xbf16, #tpu.memory_space<vmem>>, vector<128x128xbf16>
    %cst_43 = arith.constant dense<0.000000e+00> : vector<8x128xf32>
    %114 = tpu.matmul %112, %113, %cst_43 {dimension_numbers = #tpu.dot_dimension_numbers<[1], [0], [0], [1], [0, 0, 1, 1], [], []>} : vector<8x128xbf16>, vector<128x128xbf16>, vector<8x128xf32> -> vector<8x128xf32>
    %115 = arith.addf %110, %114 : vector<8x128xf32>
    %116 = math.tanh %115 : vector<8x128xf32>
    %117 = arith.subf %89, %116 : vector<8x128xf32>
    %118 = arith.mulf %108, %117 : vector<8x128xf32>
    %119 = arith.addf %116, %118 : vector<8x128xf32>
    %120 = arith.index_cast %c3_i32 : i32 to index
    %c0_44 = arith.constant 0 : index
    %c0_45 = arith.constant 0 : index
    %121 = vector.load %arg6[%120, %c0_44, %c0_45] : memref<8x8x128xf32, #tpu.memory_space<vmem>>, vector<1x8x128xf32>
    %122 = vector.shape_cast %121 : vector<1x8x128xf32> to vector<8x128xf32>
    %123 = vector.shape_cast %119 : vector<8x128xf32> to vector<1x8x128xf32>
    tpu.vector_store %arg6[%120, %c0_44, %c0_45], %123 {strides = array<i32>} : memref<8x8x128xf32, #tpu.memory_space<vmem>>, vector<1x8x128xf32>,
    %c4_i32 = arith.constant 4 : i32
    %124 = arith.index_cast %c4_i32 : i32 to index
    %c0_46 = arith.constant 0 : index
    %c0_47 = arith.constant 0 : index
    %125 = vector.load %arg2[%124, %c0_46, %c0_47] : memref<8x8x384xbf16, #tpu.memory_space<vmem>>, vector<1x8x384xbf16>
    %126 = vector.shape_cast %125 : vector<1x8x384xbf16> to vector<8x384xbf16>
    %127 = arith.extf %126 : vector<8x384xbf16> to vector<8x384xf32>
    %128 = vector.extract_strided_slice %127 {offsets = [0, 0], sizes = [8, 256], strides = [1, 1]} : vector<8x384xf32> to vector<8x256xf32>
    %129 = arith.truncf %119 : vector<8x128xf32> to vector<8x128xbf16>
    %c0_48 = arith.constant 0 : index
    %c0_49 = arith.constant 0 : index
    %130 = vector.load %arg4[%c0_48, %c0_49] : memref<128x256xbf16, #tpu.memory_space<vmem>>, vector<128x256xbf16>
    %cst_50 = arith.constant dense<0.000000e+00> : vector<8x256xf32>
    %131 = tpu.matmul %129, %130, %cst_50 {dimension_numbers = #tpu.dot_dimension_numbers<[1], [0], [0], [1], [0, 0, 1, 1], [], []>} : vector<8x128xbf16>, vector<128x256xbf16>, vector<8x256xf32> -> vector<8x256xf32>
    %132 = arith.addf %128, %131 : vector<8x256xf32>
    %133 = arith.negf %132 : vector<8x256xf32>
    %134 = math.exp %133 : vector<8x256xf32>
    %cst_51 = arith.constant 1.000000e+00 : f32
    %135 = vector.broadcast %cst_51 : f32 to vector<8x256xf32>
    %136 = arith.addf %135, %134 : vector<8x256xf32>
    %137 = arith.divf %135, %136 : vector<8x256xf32>
    %138 = vector.extract_strided_slice %137 {offsets = [0, 0], sizes = [8, 128], strides = [1, 1]} : vector<8x256xf32> to vector<8x128xf32>
    %139 = vector.extract_strided_slice %137 {offsets = [0, 128], sizes = [8, 128], strides = [1, 1]} : vector<8x256xf32> to vector<8x128xf32>
    %140 = vector.extract_strided_slice %127 {offsets = [0, 256], sizes = [8, 128], strides = [1, 1]} : vector<8x384xf32> to vector<8x128xf32>
    %141 = arith.mulf %139, %119 : vector<8x128xf32>
    %142 = arith.truncf %141 : vector<8x128xf32> to vector<8x128xbf16>
    %c0_52 = arith.constant 0 : index
    %c0_53 = arith.constant 0 : index
    %143 = vector.load %arg5[%c0_52, %c0_53] : memref<128x128xbf16, #tpu.memory_space<vmem>>, vector<128x128xbf16>
    %cst_54 = arith.constant dense<0.000000e+00> : vector<8x128xf32>
    %144 = tpu.matmul %142, %143, %cst_54 {dimension_numbers = #tpu.dot_dimension_numbers<[1], [0], [0], [1], [0, 0, 1, 1], [], []>} : vector<8x128xbf16>, vector<128x128xbf16>, vector<8x128xf32> -> vector<8x128xf32>
    %145 = arith.addf %140, %144 : vector<8x128xf32>
    %146 = math.tanh %145 : vector<8x128xf32>
    %147 = arith.subf %119, %146 : vector<8x128xf32>
    %148 = arith.mulf %138, %147 : vector<8x128xf32>
    %149 = arith.addf %146, %148 : vector<8x128xf32>
    %150 = arith.index_cast %c4_i32 : i32 to index
    %c0_55 = arith.constant 0 : index
    %c0_56 = arith.constant 0 : index
    %151 = vector.load %arg6[%150, %c0_55, %c0_56] : memref<8x8x128xf32, #tpu.memory_space<vmem>>, vector<1x8x128xf32>
    %152 = vector.shape_cast %151 : vector<1x8x128xf32> to vector<8x128xf32>
    %153 = vector.shape_cast %149 : vector<8x128xf32> to vector<1x8x128xf32>
    tpu.vector_store %arg6[%150, %c0_55, %c0_56], %153 {strides = array<i32>} : memref<8x8x128xf32, #tpu.memory_space<vmem>>, vector<1x8x128xf32>,
    %c5_i32 = arith.constant 5 : i32
    %154 = arith.index_cast %c5_i32 : i32 to index
    %c0_57 = arith.constant 0 : index
    %c0_58 = arith.constant 0 : index
    %155 = vector.load %arg2[%154, %c0_57, %c0_58] : memref<8x8x384xbf16, #tpu.memory_space<vmem>>, vector<1x8x384xbf16>
    %156 = vector.shape_cast %155 : vector<1x8x384xbf16> to vector<8x384xbf16>
    %157 = arith.extf %156 : vector<8x384xbf16> to vector<8x384xf32>
    %158 = vector.extract_strided_slice %157 {offsets = [0, 0], sizes = [8, 256], strides = [1, 1]} : vector<8x384xf32> to vector<8x256xf32>
    %159 = arith.truncf %149 : vector<8x128xf32> to vector<8x128xbf16>
    %c0_59 = arith.constant 0 : index
    %c0_60 = arith.constant 0 : index
    %160 = vector.load %arg4[%c0_59, %c0_60] : memref<128x256xbf16, #tpu.memory_space<vmem>>, vector<128x256xbf16>
    %cst_61 = arith.constant dense<0.000000e+00> : vector<8x256xf32>
    %161 = tpu.matmul %159, %160, %cst_61 {dimension_numbers = #tpu.dot_dimension_numbers<[1], [0], [0], [1], [0, 0, 1, 1], [], []>} : vector<8x128xbf16>, vector<128x256xbf16>, vector<8x256xf32> -> vector<8x256xf32>
    %162 = arith.addf %158, %161 : vector<8x256xf32>
    %163 = arith.negf %162 : vector<8x256xf32>
    %164 = math.exp %163 : vector<8x256xf32>
    %cst_62 = arith.constant 1.000000e+00 : f32
    %165 = vector.broadcast %cst_62 : f32 to vector<8x256xf32>
    %166 = arith.addf %165, %164 : vector<8x256xf32>
    %167 = arith.divf %165, %166 : vector<8x256xf32>
    %168 = vector.extract_strided_slice %167 {offsets = [0, 0], sizes = [8, 128], strides = [1, 1]} : vector<8x256xf32> to vector<8x128xf32>
    %169 = vector.extract_strided_slice %167 {offsets = [0, 128], sizes = [8, 128], strides = [1, 1]} : vector<8x256xf32> to vector<8x128xf32>
    %170 = vector.extract_strided_slice %157 {offsets = [0, 256], sizes = [8, 128], strides = [1, 1]} : vector<8x384xf32> to vector<8x128xf32>
    %171 = arith.mulf %169, %149 : vector<8x128xf32>
    %172 = arith.truncf %171 : vector<8x128xf32> to vector<8x128xbf16>
    %c0_63 = arith.constant 0 : index
    %c0_64 = arith.constant 0 : index
    %173 = vector.load %arg5[%c0_63, %c0_64] : memref<128x128xbf16, #tpu.memory_space<vmem>>, vector<128x128xbf16>
    %cst_65 = arith.constant dense<0.000000e+00> : vector<8x128xf32>
    %174 = tpu.matmul %172, %173, %cst_65 {dimension_numbers = #tpu.dot_dimension_numbers<[1], [0], [0], [1], [0, 0, 1, 1], [], []>} : vector<8x128xbf16>, vector<128x128xbf16>, vector<8x128xf32> -> vector<8x128xf32>
    %175 = arith.addf %170, %174 : vector<8x128xf32>
    %176 = math.tanh %175 : vector<8x128xf32>
    %177 = arith.subf %149, %176 : vector<8x128xf32>
    %178 = arith.mulf %168, %177 : vector<8x128xf32>
    %179 = arith.addf %176, %178 : vector<8x128xf32>
    %180 = arith.index_cast %c5_i32 : i32 to index
    %c0_66 = arith.constant 0 : index
    %c0_67 = arith.constant 0 : index
    %181 = vector.load %arg6[%180, %c0_66, %c0_67] : memref<8x8x128xf32, #tpu.memory_space<vmem>>, vector<1x8x128xf32>
    %182 = vector.shape_cast %181 : vector<1x8x128xf32> to vector<8x128xf32>
    %183 = vector.shape_cast %179 : vector<8x128xf32> to vector<1x8x128xf32>
    tpu.vector_store %arg6[%180, %c0_66, %c0_67], %183 {strides = array<i32>} : memref<8x8x128xf32, #tpu.memory_space<vmem>>, vector<1x8x128xf32>,
    %c6_i32 = arith.constant 6 : i32
    %184 = arith.index_cast %c6_i32 : i32 to index
    %c0_68 = arith.constant 0 : index
    %c0_69 = arith.constant 0 : index
    %185 = vector.load %arg2[%184, %c0_68, %c0_69] : memref<8x8x384xbf16, #tpu.memory_space<vmem>>, vector<1x8x384xbf16>
    %186 = vector.shape_cast %185 : vector<1x8x384xbf16> to vector<8x384xbf16>
    %187 = arith.extf %186 : vector<8x384xbf16> to vector<8x384xf32>
    %188 = vector.extract_strided_slice %187 {offsets = [0, 0], sizes = [8, 256], strides = [1, 1]} : vector<8x384xf32> to vector<8x256xf32>
    %189 = arith.truncf %179 : vector<8x128xf32> to vector<8x128xbf16>
    %c0_70 = arith.constant 0 : index
    %c0_71 = arith.constant 0 : index
    %190 = vector.load %arg4[%c0_70, %c0_71] : memref<128x256xbf16, #tpu.memory_space<vmem>>, vector<128x256xbf16>
    %cst_72 = arith.constant dense<0.000000e+00> : vector<8x256xf32>
    %191 = tpu.matmul %189, %190, %cst_72 {dimension_numbers = #tpu.dot_dimension_numbers<[1], [0], [0], [1], [0, 0, 1, 1], [], []>} : vector<8x128xbf16>, vector<128x256xbf16>, vector<8x256xf32> -> vector<8x256xf32>
    %192 = arith.addf %188, %191 : vector<8x256xf32>
    %193 = arith.negf %192 : vector<8x256xf32>
    %194 = math.exp %193 : vector<8x256xf32>
    %cst_73 = arith.constant 1.000000e+00 : f32
    %195 = vector.broadcast %cst_73 : f32 to vector<8x256xf32>
    %196 = arith.addf %195, %194 : vector<8x256xf32>
    %197 = arith.divf %195, %196 : vector<8x256xf32>
    %198 = vector.extract_strided_slice %197 {offsets = [0, 0], sizes = [8, 128], strides = [1, 1]} : vector<8x256xf32> to vector<8x128xf32>
    %199 = vector.extract_strided_slice %197 {offsets = [0, 128], sizes = [8, 128], strides = [1, 1]} : vector<8x256xf32> to vector<8x128xf32>
    %200 = vector.extract_strided_slice %187 {offsets = [0, 256], sizes = [8, 128], strides = [1, 1]} : vector<8x384xf32> to vector<8x128xf32>
    %201 = arith.mulf %199, %179 : vector<8x128xf32>
    %202 = arith.truncf %201 : vector<8x128xf32> to vector<8x128xbf16>
    %c0_74 = arith.constant 0 : index
    %c0_75 = arith.constant 0 : index
    %203 = vector.load %arg5[%c0_74, %c0_75] : memref<128x128xbf16, #tpu.memory_space<vmem>>, vector<128x128xbf16>
    %cst_76 = arith.constant dense<0.000000e+00> : vector<8x128xf32>
    %204 = tpu.matmul %202, %203, %cst_76 {dimension_numbers = #tpu.dot_dimension_numbers<[1], [0], [0], [1], [0, 0, 1, 1], [], []>} : vector<8x128xbf16>, vector<128x128xbf16>, vector<8x128xf32> -> vector<8x128xf32>
    %205 = arith.addf %200, %204 : vector<8x128xf32>
    %206 = math.tanh %205 : vector<8x128xf32>
    %207 = arith.subf %179, %206 : vector<8x128xf32>
    %208 = arith.mulf %198, %207 : vector<8x128xf32>
    %209 = arith.addf %206, %208 : vector<8x128xf32>
    %210 = arith.index_cast %c6_i32 : i32 to index
    %c0_77 = arith.constant 0 : index
    %c0_78 = arith.constant 0 : index
    %211 = vector.load %arg6[%210, %c0_77, %c0_78] : memref<8x8x128xf32, #tpu.memory_space<vmem>>, vector<1x8x128xf32>
    %212 = vector.shape_cast %211 : vector<1x8x128xf32> to vector<8x128xf32>
    %213 = vector.shape_cast %209 : vector<8x128xf32> to vector<1x8x128xf32>
    tpu.vector_store %arg6[%210, %c0_77, %c0_78], %213 {strides = array<i32>} : memref<8x8x128xf32, #tpu.memory_space<vmem>>, vector<1x8x128xf32>,
    %c7_i32 = arith.constant 7 : i32
    %214 = arith.index_cast %c7_i32 : i32 to index
    %c0_79 = arith.constant 0 : index
    %c0_80 = arith.constant 0 : index
    %215 = vector.load %arg2[%214, %c0_79, %c0_80] : memref<8x8x384xbf16, #tpu.memory_space<vmem>>, vector<1x8x384xbf16>
    %216 = vector.shape_cast %215 : vector<1x8x384xbf16> to vector<8x384xbf16>
    %217 = arith.extf %216 : vector<8x384xbf16> to vector<8x384xf32>
    %218 = vector.extract_strided_slice %217 {offsets = [0, 0], sizes = [8, 256], strides = [1, 1]} : vector<8x384xf32> to vector<8x256xf32>
    %219 = arith.truncf %209 : vector<8x128xf32> to vector<8x128xbf16>
    %c0_81 = arith.constant 0 : index
    %c0_82 = arith.constant 0 : index
    %220 = vector.load %arg4[%c0_81, %c0_82] : memref<128x256xbf16, #tpu.memory_space<vmem>>, vector<128x256xbf16>
    %cst_83 = arith.constant dense<0.000000e+00> : vector<8x256xf32>
    %221 = tpu.matmul %219, %220, %cst_83 {dimension_numbers = #tpu.dot_dimension_numbers<[1], [0], [0], [1], [0, 0, 1, 1], [], []>} : vector<8x128xbf16>, vector<128x256xbf16>, vector<8x256xf32> -> vector<8x256xf32>
    %222 = arith.addf %218, %221 : vector<8x256xf32>
    %223 = arith.negf %222 : vector<8x256xf32>
    %224 = math.exp %223 : vector<8x256xf32>
    %cst_84 = arith.constant 1.000000e+00 : f32
    %225 = vector.broadcast %cst_84 : f32 to vector<8x256xf32>
    %226 = arith.addf %225, %224 : vector<8x256xf32>
    %227 = arith.divf %225, %226 : vector<8x256xf32>
    %228 = vector.extract_strided_slice %227 {offsets = [0, 0], sizes = [8, 128], strides = [1, 1]} : vector<8x256xf32> to vector<8x128xf32>
    %229 = vector.extract_strided_slice %227 {offsets = [0, 128], sizes = [8, 128], strides = [1, 1]} : vector<8x256xf32> to vector<8x128xf32>
    %230 = vector.extract_strided_slice %217 {offsets = [0, 256], sizes = [8, 128], strides = [1, 1]} : vector<8x384xf32> to vector<8x128xf32>
    %231 = arith.mulf %229, %209 : vector<8x128xf32>
    %232 = arith.truncf %231 : vector<8x128xf32> to vector<8x128xbf16>
    %c0_85 = arith.constant 0 : index
    %c0_86 = arith.constant 0 : index
    %233 = vector.load %arg5[%c0_85, %c0_86] : memref<128x128xbf16, #tpu.memory_space<vmem>>, vector<128x128xbf16>
    %cst_87 = arith.constant dense<0.000000e+00> : vector<8x128xf32>
    %234 = tpu.matmul %232, %233, %cst_87 {dimension_numbers = #tpu.dot_dimension_numbers<[1], [0], [0], [1], [0, 0, 1, 1], [], []>} : vector<8x128xbf16>, vector<128x128xbf16>, vector<8x128xf32> -> vector<8x128xf32>
    %235 = arith.addf %230, %234 : vector<8x128xf32>
    %236 = math.tanh %235 : vector<8x128xf32>
    %237 = arith.subf %209, %236 : vector<8x128xf32>
    %238 = arith.mulf %228, %237 : vector<8x128xf32>
    %239 = arith.addf %236, %238 : vector<8x128xf32>
    %240 = arith.index_cast %c7_i32 : i32 to index
    %c0_88 = arith.constant 0 : index
    %c0_89 = arith.constant 0 : index
    %241 = vector.load %arg6[%240, %c0_88, %c0_89] : memref<8x8x128xf32, #tpu.memory_space<vmem>>, vector<1x8x128xf32>
    %242 = vector.shape_cast %241 : vector<1x8x128xf32> to vector<8x128xf32>
    %243 = vector.shape_cast %239 : vector<8x128xf32> to vector<1x8x128xf32>
    tpu.vector_store %arg6[%240, %c0_88, %c0_89], %243 {strides = array<i32>} : memref<8x8x128xf32, #tpu.memory_space<vmem>>, vector<1x8x128xf32>,
    %c8_i32 = arith.constant 8 : i32
    %c0_90 = arith.constant 0 : index
    %c0_91 = arith.constant 0 : index
    %244 = vector.load %arg7[%c0_90, %c0_91] : memref<8x128xf32, #tpu.memory_space<vmem>>, vector<8x128xf32>
    tpu.vector_store %arg7[%c0_90, %c0_91], %239 {strides = array<i32>} : memref<8x128xf32, #tpu.memory_space<vmem>>, vector<8x128xf32>,
    return
  }
  func.func @transform_0(%arg0: i32, %arg1: i32) -> (i32, i32, i32) {
    %c0_i32 = arith.constant 0 : i32
    %c0_i32_0 = arith.constant 0 : i32
    return %arg1, %arg0, %c0_i32 : i32, i32, i32
  }
  func.func @transform_1(%arg0: i32, %arg1: i32) -> (i32, i32) {
    %c0_i32 = arith.constant 0 : i32
    %c0_i32_0 = arith.constant 0 : i32
    return %arg0, %c0_i32 : i32, i32
  }
  func.func @transform_2(%arg0: i32, %arg1: i32) -> (i32, i32) {
    %c0_i32 = arith.constant 0 : i32
    %c0_i32_0 = arith.constant 0 : i32
    %c0_i32_1 = arith.constant 0 : i32
    return %c0_i32, %c0_i32_0 : i32, i32
  }
  func.func @transform_3(%arg0: i32, %arg1: i32) -> (i32, i32) {
    %c0_i32 = arith.constant 0 : i32
    %c0_i32_0 = arith.constant 0 : i32
    %c0_i32_1 = arith.constant 0 : i32
    return %c0_i32, %c0_i32_0 : i32, i32
  }
  func.func @transform_4(%arg0: i32, %arg1: i32) -> (i32, i32, i32) {
    %c0_i32 = arith.constant 0 : i32
    %c0_i32_0 = arith.constant 0 : i32
    return %arg1, %arg0, %c0_i32 : i32, i32, i32
  }
}

</mosaic_0001>

<llo_original>
// kernel: tpu_custom_call.1
$region0: #{tpu_custom_call.1}
  #allocation0 [shape = 'u32[]', space=smem, size = 0x4, offset = 0x4, fixed_abs, tag = 'smem constant byte address 0x4 - core index']
  #allocation1 [shape = 'u32[144,128]{1,0:T(1,128)}', space=vmem, size = 0x12000, scoped, tag = 'internal scratch']
  #allocation2 [shape = 'f32[8,128]{1,0:T(8,128)}', space=vmem, size = 0x1000, scoped, tag = 'scratch operand']
  %s0 = inlined_call_operand.hbm [shape: bf16[8,8,384], index: 0, kind: input, shape index: {}]
  %s1 = inlined_call_operand.hbm [shape: f32[8,128], index: 1, kind: input, shape index: {}]
  %s2 = inlined_call_operand.hbm [shape: bf16[128,256], index: 2, kind: input, shape index: {}]
  %s3 = inlined_call_operand.hbm [shape: bf16[128,128], index: 3, kind: input, shape index: {}]
  %s4 = inlined_call_operand.hbm [shape: f32[8,8,128], index: 4, kind: output, shape index: {}]
  %s5 = sld [smem:[#allocation0]]
  $region46: #{tpu_custom_call.1} parent=0
    _
  %s7 = ssub.s32 1, %s5
  %s8 = scalar_select 0, %s7, %s5
  $region1: #{tpu_custom_call.1} parent=0
    #allocation3 [shape = 'u8[49152]{0}', space=vmem, size = 0xc000, scoped, tag = 'input window, operand 0, single buffered']
    #allocation4 [shape = 's32[1]{0}', space=sflag, size = 0x4, scoped, tag = 'scoped memory for tpu_custom_call.1']
    #allocation5 [shape = 's32[1]{0}', space=sflag, size = 0x4, scoped, tag = 'scoped memory for tpu_custom_call.1']
    #allocation6 [shape = 'u8[4096]{0}', space=vmem, size = 0x1000, scoped, tag = 'input window, operand 1, single buffered']
    #allocation7 [shape = 's32[1]{0}', space=sflag, size = 0x4, scoped, tag = 'scoped memory for tpu_custom_call.1']
    #allocation8 [shape = 'u8[65536]{0}', space=vmem, size = 0x10000, scoped, tag = 'input window, operand 2, single buffered']
    #allocation9 [shape = 'u8[32768]{0}', space=vmem, size = 0x8000, scoped, tag = 'input window, operand 3, single buffered']
    #allocation10 [shape = 's32[1]{0}', space=sflag, size = 0x4, scoped, tag = 'scoped memory for tpu_custom_call.1']
    #allocation11 [shape = 'u8[32768]{0}', space=vmem, size = 0x8000, scoped, tag = 'output window, operand 0, single buffered']
    %9 = vsyncpa [#allocation4], 0
    %10 = vsyncpa [#allocation7], 0
    %11 = vsyncpa [#allocation10], 0
    %12 = vsyncpa [#allocation5], 0
    // Predicated region
    $region2: #{tpu_custom_call.1} parent=1 // pred_check
      _
    $region3: #{tpu_custom_call.1} parent=1 // pred_check_branch
      %14 = sbr.rel (0) target = $region5
    $region4: #{tpu_custom_call.1} parent=1 // pred_region
      %s16 = ssub.s32 1536, 1536
      %17 = vsyncadd [#allocation4], %s16
      %s18 = sshll.u32 [#allocation3], 4
      %s19 = int_to_ptr.vmem [resolvable:$true] %s18
      %24 = dma.hbm_to_vmem [thread:$0]  %s0, 1536, %s19, [#allocation4], 192, 192, 12
    $region5: #{tpu_custom_call.1} parent=1 // pred_fallthru
      _
    // Predicated region
    $region6: #{tpu_custom_call.1} parent=1 // pred_check
      _
    $region7: #{tpu_custom_call.1} parent=1 // pred_check_branch
      %26 = sbr.rel (0) target = $region9
    $region8: #{tpu_custom_call.1} parent=1 // pred_region
      %s28 = ssub.s32 128, 128
      %29 = vsyncadd [#allocation7], %s28
      %s31 = sshll.u32 [#allocation6], 4
      %s32 = int_to_ptr.vmem [resolvable:$true] %s31
      %34 = dma.hbm_to_vmem [thread:$0]  %s1, 128, %s32, [#allocation7]
    $region9: #{tpu_custom_call.1} parent=1 // pred_fallthru
      _
    // Predicated region
    $region10: #{tpu_custom_call.1} parent=1 // pred_check
      _
    $region11: #{tpu_custom_call.1} parent=1 // pred_check_branch
      %36 = sbr.rel (0) target = $region13
    $region12: #{tpu_custom_call.1} parent=1 // pred_region
      %s38 = ssub.s32 2048, 2048
      %39 = vsyncadd [#allocation7], %s38
      %s40 = sshll.u32 [#allocation8], 4
      %s41 = int_to_ptr.vmem [resolvable:$true] %s40
      %46 = dma.hbm_to_vmem [thread:$0]  %s2, 2048, %s41, [#allocation7], 128, 128, 8
    $region13: #{tpu_custom_call.1} parent=1 // pred_fallthru
      _
    // Predicated region
    $region14: #{tpu_custom_call.1} parent=1 // pred_check
      _
    $region15: #{tpu_custom_call.1} parent=1 // pred_check_branch
      %48 = sbr.rel (0) target = $region17
    $region16: #{tpu_custom_call.1} parent=1 // pred_region
      %s50 = ssub.s32 1024, 1024
      %51 = vsyncadd [#allocation10], %s50
      %s52 = sshll.u32 [#allocation9], 4
      %s53 = int_to_ptr.vmem [resolvable:$true] %s52
      %58 = dma.hbm_to_vmem [thread:$0]  %s3, 1024, %s53, [#allocation10], 64, 64, 4
    $region17: #{tpu_custom_call.1} parent=1 // pred_fallthru
      _
    // Predicated region
    $region18: #{tpu_custom_call.1} parent=1 // pred_check
      _
    $region19: #{tpu_custom_call.1} parent=1 // pred_check_branch
      %60 = sbr.rel (0) target = $region21
    $region20: #{tpu_custom_call.1} parent=1 // pred_region
      %61 = dma.done [#allocation4], 1536
    $region21: #{tpu_custom_call.1} parent=1 // pred_fallthru
      _
    // Predicated region
    $region22: #{tpu_custom_call.1} parent=1 // pred_check
      _
    $region23: #{tpu_custom_call.1} parent=1 // pred_check_branch
      %63 = sbr.rel (0) target = $region25
    $region24: #{tpu_custom_call.1} parent=1 // pred_region
      %64 = dma.done [#allocation7], 128
    $region25: #{tpu_custom_call.1} parent=1 // pred_fallthru
      _
    // Predicated region
    $region26: #{tpu_custom_call.1} parent=1 // pred_check
      _
    $region27: #{tpu_custom_call.1} parent=1 // pred_check_branch
      %66 = sbr.rel (0) target = $region29
    $region28: #{tpu_custom_call.1} parent=1 // pred_region
      %67 = dma.done [#allocation7], 2048
    $region29: #{tpu_custom_call.1} parent=1 // pred_fallthru
      _
    // Predicated region
    $region30: #{tpu_custom_call.1} parent=1 // pred_check
      _
    $region31: #{tpu_custom_call.1} parent=1 // pred_check_branch
      %69 = sbr.rel (0) target = $region33
    $region32: #{tpu_custom_call.1} parent=1 // pred_region
      %70 = dma.done [#allocation10], 1024
    $region33: #{tpu_custom_call.1} parent=1 // pred_fallthru
      _
    %p72 = scmp.eq.s32.totalorder 0, 0
    // Predicated region
    $region34: #{tpu_custom_call.1} parent=1 // pred_check
      %p73 = pneg %p72
    $region35: #{tpu_custom_call.1} parent=1 // pred_check_branch
      %75 = sbr.rel (%p73) target = $region37
    $region36: #{tpu_custom_call.1} parent=1 // pred_region
      %v76 = vld [vmem:[#allocation6] sm:$0xff]
      %77 = vst [vmem:[#allocation2] sm:$0xff] %v76
    $region37: #{tpu_custom_call.1} parent=1 // pred_fallthru
      _
    %v78 = vld [vmem:[#allocation2] sm:$0xff]
    %v79 = vld [vmem:[#allocation3] sm:$0xff]
    %v80 = vld [vmem:[#allocation3 + $0x8] sm:$0xf]
    %v81 = vunpack.c.l.bf16 %v79
    %v82 = vunpack.c.h.bf16 %v79
    %v83 = vunpack.c.l.bf16 %v80
    %v84 = vpack.c.bf16 %v78, %v78
    %v85 = vld [vmem:[#allocation8] sm:$0xff]
    %v86 = vld [vmem:[#allocation8 + $0x8] sm:$0xff]
    %v87 = vld [vmem:[#allocation8 + $0x10] sm:$0xff]
    %v88 = vld [vmem:[#allocation8 + $0x18] sm:$0xff]
    %v89 = vld [vmem:[#allocation8 + $0x20] sm:$0xff]
    %v90 = vld [vmem:[#allocation8 + $0x28] sm:$0xff]
    %v91 = vld [vmem:[#allocation8 + $0x30] sm:$0xff]
    %v92 = vld [vmem:[#allocation8 + $0x38] sm:$0xff]
    %v93 = vld [vmem:[#allocation8 + $0x40] sm:$0xff]
    %v94 = vld [vmem:[#allocation8 + $0x48] sm:$0xff]
    %v95 = vld [vmem:[#allocation8 + $0x50] sm:$0xff]
    %v96 = vld [vmem:[#allocation8 + $0x58] sm:$0xff]
    %v97 = vld [vmem:[#allocation8 + $0x60] sm:$0xff]
    %v98 = vld [vmem:[#allocation8 + $0x68] sm:$0xff]
    %v99 = vld [vmem:[#allocation8 + $0x70] sm:$0xff]
    %v100 = vld [vmem:[#allocation8 + $0x78] sm:$0xff]
    %v117 = vunpack.c.l.b16 %v85
    %v118 = vunpack.c.h.b16 %v85
    %v119 = vunpack.c.l.b16 %v86
    %v120 = vunpack.c.h.b16 %v86
    %v121 = vunpack.c.l.b16 %v87
    %v122 = vunpack.c.h.b16 %v87
    %v123 = vunpack.c.l.b16 %v88
    %v124 = vunpack.c.h.b16 %v88
    %v125 = vunpack.c.l.b16 %v89
    %v126 = vunpack.c.h.b16 %v89
    %v127 = vunpack.c.l.b16 %v90
    %v128 = vunpack.c.h.b16 %v90
    %v129 = vunpack.c.l.b16 %v91
    %v130 = vunpack.c.h.b16 %v91
    %v131 = vunpack.c.l.b16 %v92
    %v132 = vunpack.c.h.b16 %v92
    %v133 = vunpack.c.l.b16 %v93
    %v134 = vunpack.c.h.b16 %v93
    %v135 = vunpack.c.l.b16 %v94
    %v136 = vunpack.c.h.b16 %v94
    %v137 = vunpack.c.l.b16 %v95
    %v138 = vunpack.c.h.b16 %v95
    %v139 = vunpack.c.l.b16 %v96
    %v140 = vunpack.c.h.b16 %v96
    %v141 = vunpack.c.l.b16 %v97
    %v142 = vunpack.c.h.b16 %v97
    %v143 = vunpack.c.l.b16 %v98
    %v144 = vunpack.c.h.b16 %v98
    %v145 = vunpack.c.l.b16 %v99
    %v146 = vunpack.c.h.b16 %v99
    %v147 = vunpack.c.l.b16 %v100
    %v148 = vunpack.c.h.b16 %v100
    %v149 = vpack.c.b16 %v119, %v117
    %v150 = vpack.c.b16 %v120, %v118
    %v151 = vpack.c.b16 %v123, %v121
    %v152 = vpack.c.b16 %v124, %v122
    %v153 = vpack.c.b16 %v127, %v125
    %v154 = vpack.c.b16 %v128, %v126
    %v155 = vpack.c.b16 %v131, %v129
    %v156 = vpack.c.b16 %v132, %v130
    %v157 = vpack.c.b16 %v135, %v133
    %v158 = vpack.c.b16 %v136, %v134
    %v159 = vpack.c.b16 %v139, %v137
    %v160 = vpack.c.b16 %v140, %v138
    %v161 = vpack.c.b16 %v143, %v141
    %v162 = vpack.c.b16 %v144, %v142
    %v163 = vpack.c.b16 %v147, %v145
    %v164 = vpack.c.b16 %v148, %v146
    %181 = vmatprep.subr.bf16.mxu0 %v164
    %182 = vmatpush1.bf16.msra.mxu0 %v163
    %183 = vmatprep.subr.bf16.mxu0 %v162
    %184 = vmatpush1.bf16.msra.mxu0 %v161
    %185 = vmatprep.subr.bf16.mxu0 %v160
    %186 = vmatpush1.bf16.msra.mxu0 %v159
    %187 = vmatprep.subr.bf16.mxu0 %v158
    %188 = vmatpush1.bf16.msra.mxu0 %v157
    %189 = vmatprep.subr.bf16.mxu0 %v156
    %190 = vmatpush1.bf16.msra.mxu0 %v155
    %191 = vmatprep.subr.bf16.mxu0 %v154
    %192 = vmatpush1.bf16.msra.mxu0 %v153
    %193 = vmatprep.subr.bf16.mxu0 %v152
    %194 = vmatpush1.bf16.msra.mxu0 %v151
    %195 = vmatprep.subr.bf16.mxu0 %v150
    %196 = vmatpush1.bf16.msra.mxu0 %v149
    %197 = vmatprep.subr.bf16.mxu0 0
    %198 = vmatpush2.bf16.msra.mxu0 0
    %199 = vmatprep.subr.bf16.mxu0 0
    %200 = vmatpush2.bf16.msra.mxu0 0
    %201 = vmatprep.subr.bf16.mxu0 0
    %202 = vmatpush2.bf16.msra.mxu0 0
    %203 = vmatprep.subr.bf16.mxu0 0
    %204 = vmatpush2.bf16.msra.mxu0 0
    %205 = vmatprep.subr.bf16.mxu0 0
    %206 = vmatpush2.bf16.msra.mxu0 0
    %207 = vmatprep.subr.bf16.mxu0 0
    %208 = vmatpush2.bf16.msra.mxu0 0
    %209 = vmatprep.subr.bf16.mxu0 0
    %210 = vmatpush2.bf16.msra.mxu0 0
    %211 = vmatprep.subr.bf16.mxu0 0
    %212 = vmatpush2.bf16.msra.mxu0 0
    %213 = vmatprep.mubr.bf16.mxu0 0
    %214 = vmatmul.mubr.bf16.gmra.mxu0 %v84
    %v215 = vpop.f32.mrf.mxu0
    %v216 = vadd.f32 0.0, %v215
    %v217 = vpop.f32.mrf.mxu0
    %v218 = vadd.f32 0.0, %v217
    %v219 = vpop.f32.mrf.mxu0
    %v220 = vpop.f32.mrf.mxu0
    %221 = vdwg.mxu0
    %v222 = vadd.f32 %v81, %v216
    %v223 = vadd.f32 %v82, %v218
    %v224 = vxor.u32 %v222, 2147483648
    %v225 = vxor.u32 %v223, 2147483648
    %v226 = vmul.f32 %v224, 1.442695
    %v227 = vpow.pop %v226
    %v228 = vmul.f32 %v225, 1.442695
    %v229 = vpow.pop %v228
    %v230 = vadd.f32 %v227, 1.0
    %v231 = vadd.f32 %v229, 1.0
    %v232 = vrcp.pop %v230
    %v233 = vmul.f32 1.0, %v232
    %v234 = vrcp.pop %v231
    %v235 = vmul.f32 1.0, %v234
    %v236 = vmul.f32 %v235, %v78
    %v237 = vpack.c.bf16 %v236, %v236
    %v238 = vld [vmem:[#allocation9] sm:$0xf]
    %v239 = vld [vmem:[#allocation9 + $0x4] sm:$0xf]
    %v240 = vld [vmem:[#allocation9 + $0x8] sm:$0xf]
    %v241 = vld [vmem:[#allocation9 + $0xc] sm:$0xf]
    %v242 = vld [vmem:[#allocation9 + $0x10] sm:$0xf]
    %v243 = vld [vmem:[#allocation9 + $0x14] sm:$0xf]
    %v244 = vld [vmem:[#allocation9 + $0x18] sm:$0xf]
    %v245 = vld [vmem:[#allocation9 + $0x1c] sm:$0xf]
    %v246 = vld [vmem:[#allocation9 + $0x20] sm:$0xf]
    %v247 = vld [vmem:[#allocation9 + $0x24] sm:$0xf]
    %v248 = vld [vmem:[#allocation9 + $0x28] sm:$0xf]
    %v249 = vld [vmem:[#allocation9 + $0x2c] sm:$0xf]
    %v250 = vld [vmem:[#allocation9 + $0x30] sm:$0xf]
    %v251 = vld [vmem:[#allocation9 + $0x34] sm:$0xf]
    %v252 = vld [vmem:[#allocation9 + $0x38] sm:$0xf]
    %v253 = vld [vmem:[#allocation9 + $0x3c] sm:$0xf]
    %v270 = vunpack.c.l.b16 %v238
    %v271 = vunpack.c.l.b16 %v239
    %v272 = vunpack.c.l.b16 %v240
    %v273 = vunpack.c.l.b16 %v241
    %v274 = vunpack.c.l.b16 %v242
    %v275 = vunpack.c.l.b16 %v243
    %v276 = vunpack.c.l.b16 %v244
    %v277 = vunpack.c.l.b16 %v245
    %v278 = vunpack.c.l.b16 %v246
    %v279 = vunpack.c.l.b16 %v247
    %v280 = vunpack.c.l.b16 %v248
    %v281 = vunpack.c.l.b16 %v249
    %v282 = vunpack.c.l.b16 %v250
    %v283 = vunpack.c.l.b16 %v251
    %v284 = vunpack.c.l.b16 %v252
    %v285 = vunpack.c.l.b16 %v253
    %v286 = vpack.c.b16 %v271, %v270
    %v287 = vpack.c.b16 %v273, %v272
    %v288 = vpack.c.b16 %v275, %v274
    %v289 = vpack.c.b16 %v277, %v276
    %v290 = vpack.c.b16 %v279, %v278
    %v291 = vpack.c.b16 %v281, %v280
    %v292 = vpack.c.b16 %v283, %v282
    %v293 = vpack.c.b16 %v285, %v284
    %302 = vmatprep.subr.bf16.mxu0 0
    %303 = vmatpush1.bf16.msra.mxu0 %v293
    %304 = vmatprep.subr.bf16.mxu0 0
    %305 = vmatpush1.bf16.msra.mxu0 %v292
    %306 = vmatprep.subr.bf16.mxu0 0
    %307 = vmatpush1.bf16.msra.mxu0 %v291
    %308 = vmatprep.subr.bf16.mxu0 0
    %309 = vmatpush1.bf16.msra.mxu0 %v290
    %310 = vmatprep.subr.bf16.mxu0 0
    %311 = vmatpush1.bf16.msra.mxu0 %v289
    %312 = vmatprep.subr.bf16.mxu0 0
    %313 = vmatpush1.bf16.msra.mxu0 %v288
    %314 = vmatprep.subr.bf16.mxu0 0
    %315 = vmatpush1.bf16.msra.mxu0 %v287
    %316 = vmatprep.subr.bf16.mxu0 0
    %317 = vmatpush1.bf16.msra.mxu0 %v286
    %318 = vmatprep.subr.bf16.mxu0 0
    %319 = vmatpush2.bf16.msra.mxu0 0
    %320 = vmatprep.subr.bf16.mxu0 0
    %321 = vmatpush2.bf16.msra.mxu0 0
    %322 = vmatprep.subr.bf16.mxu0 0
    %323 = vmatpush2.bf16.msra.mxu0 0
    %324 = vmatprep.subr.bf16.mxu0 0
    %325 = vmatpush2.bf16.msra.mxu0 0
    %326 = vmatprep.subr.bf16.mxu0 0
    %327 = vmatpush2.bf16.msra.mxu0 0
    %328 = vmatprep.subr.bf16.mxu0 0
    %329 = vmatpush2.bf16.msra.mxu0 0
    %330 = vmatprep.subr.bf16.mxu0 0
    %331 = vmatpush2.bf16.msra.mxu0 0
    %332 = vmatprep.subr.bf16.mxu0 0
    %333 = vmatpush2.bf16.msra.mxu0 0
    %334 = vmatprep.mubr.bf16.mxu0 0
    %335 = vmatmul.mubr.bf16.gmra.mxu0 %v237
    %v336 = vpop.f32.mrf.mxu0
    %v337 = vadd.f32 0.0, %v336
    %v338 = vpop.f32.mrf.mxu0
    %v339 = vpop.f32.mrf.mxu0
    %v340 = vpop.f32.mrf.mxu0
    %341 = vdwg.mxu0
    %v342 = vadd.f32 %v83, %v337
    %v343 = vtanh.pop %v342
    %v344 = vsub.f32 %v78, %v343
    %v345 = vmul.f32 %v233, %v344
    %v346 = vadd.f32 %v343, %v345
    %347 = vst [vmem:[#allocation11] sm:$0xff] %v346
    %s348 = scalar_lea.vmem [#allocation3], 12
    %v349 = vld [vmem:[%s348] sm:$0xff]
    %v350 = vld [vmem:[%s348 + $0x8] sm:$0xf]
    %v351 = vunpack.c.l.bf16 %v349
    %v352 = vunpack.c.h.bf16 %v349
    %v353 = vunpack.c.l.bf16 %v350
    %v354 = vpack.c.bf16 %v346, %v346
    %v355 = vld [vmem:[#allocation8] sm:$0xff]
    %v356 = vld [vmem:[#allocation8 + $0x8] sm:$0xff]
    %v357 = vld [vmem:[#allocation8 + $0x10] sm:$0xff]
    %v358 = vld [vmem:[#allocation8 + $0x18] sm:$0xff]
    %v359 = vld [vmem:[#allocation8 + $0x20] sm:$0xff]
    %v360 = vld [vmem:[#allocation8 + $0x28] sm:$0xff]
    %v361 = vld [vmem:[#allocation8 + $0x30] sm:$0xff]
    %v362 = vld [vmem:[#allocation8 + $0x38] sm:$0xff]
    %v363 = vld [vmem:[#allocation8 + $0x40] sm:$0xff]
    %v364 = vld [vmem:[#allocation8 + $0x48] sm:$0xff]
    %v365 = vld [vmem:[#allocation8 + $0x50] sm:$0xff]
    %v366 = vld [vmem:[#allocation8 + $0x58] sm:$0xff]
    %v367 = vld [vmem:[#allocation8 + $0x60] sm:$0xff]
    %v368 = vld [vmem:[#allocation8 + $0x68] sm:$0xff]
    %v369 = vld [vmem:[#allocation8 + $0x70] sm:$0xff]
    %v370 = vld [vmem:[#allocation8 + $0x78] sm:$0xff]
    %v387 = vunpack.c.l.b16 %v355
    %v388 = vunpack.c.h.b16 %v355
    %v389 = vunpack.c.l.b16 %v356
    %v390 = vunpack.c.h.b16 %v356
    %v391 = vunpack.c.l.b16 %v357
    %v392 = vunpack.c.h.b16 %v357
    %v393 = vunpack.c.l.b16 %v358
    %v394 = vunpack.c.h.b16 %v358
    %v395 = vunpack.c.l.b16 %v359
    %v396 = vunpack.c.h.b16 %v359
    %v397 = vunpack.c.l.b16 %v360
    %v398 = vunpack.c.h.b16 %v360
    %v399 = vunpack.c.l.b16 %v361
    %v400 = vunpack.c.h.b16 %v361
    %v401 = vunpack.c.l.b16 %v362
    %v402 = vunpack.c.h.b16 %v362
    %v403 = vunpack.c.l.b16 %v363
    %v404 = vunpack.c.h.b16 %v363
    %v405 = vunpack.c.l.b16 %v364
    %v406 = vunpack.c.h.b16 %v364
    %v407 = vunpack.c.l.b16 %v365
    %v408 = vunpack.c.h.b16 %v365
    %v409 = vunpack.c.l.b16 %v366
    %v410 = vunpack.c.h.b16 %v366
    %v411 = vunpack.c.l.b16 %v367
    %v412 = vunpack.c.h.b16 %v367
    %v413 = vunpack.c.l.b16 %v368
    %v414 = vunpack.c.h.b16 %v368
    %v415 = vunpack.c.l.b16 %v369
    %v416 = vunpack.c.h.b16 %v369
    %v417 = vunpack.c.l.b16 %v370
    %v418 = vunpack.c.h.b16 %v370
    %v419 = vpack.c.b16 %v389, %v387
    %v420 = vpack.c.b16 %v390, %v388
    %v421 = vpack.c.b16 %v393, %v391
    %v422 = vpack.c.b16 %v394, %v392
    %v423 = vpack.c.b16 %v397, %v395
    %v424 = vpack.c.b16 %v398, %v396
    %v425 = vpack.c.b16 %v401, %v399
    %v426 = vpack.c.b16 %v402, %v400
    %v427 = vpack.c.b16 %v405, %v403
    %v428 = vpack.c.b16 %v406, %v404
    %v429 = vpack.c.b16 %v409, %v407
    %v430 = vpack.c.b16 %v410, %v408
    %v431 = vpack.c.b16 %v413, %v411
    %v432 = vpack.c.b16 %v414, %v412
    %v433 = vpack.c.b16 %v417, %v415
    %v434 = vpack.c.b16 %v418, %v416
    %451 = vmatprep.subr.bf16.mxu0 %v434
    %452 = vmatpush1.bf16.msra.mxu0 %v433
    %453 = vmatprep.subr.bf16.mxu0 %v432
    %454 = vmatpush1.bf16.msra.mxu0 %v431
    %455 = vmatprep.subr.bf16.mxu0 %v430
    %456 = vmatpush1.bf16.msra.mxu0 %v429
    %457 = vmatprep.subr.bf16.mxu0 %v428
    %458 = vmatpush1.bf16.msra.mxu0 %v427
    %459 = vmatprep.subr.bf16.mxu0 %v426
    %460 = vmatpush1.bf16.msra.mxu0 %v425
    %461 = vmatprep.subr.bf16.mxu0 %v424
    %462 = vmatpush1.bf16.msra.mxu0 %v423
    %463 = vmatprep.subr.bf16.mxu0 %v422
    %464 = vmatpush1.bf16.msra.mxu0 %v421
    %465 = vmatprep.subr.bf16.mxu0 %v420
    %466 = vmatpush1.bf16.msra.mxu0 %v419
    %467 = vmatprep.subr.bf16.mxu0 0
    %468 = vmatpush2.bf16.msra.mxu0 0
    %469 = vmatprep.subr.bf16.mxu0 0
    %470 = vmatpush2.bf16.msra.mxu0 0
    %471 = vmatprep.subr.bf16.mxu0 0
    %472 = vmatpush2.bf16.msra.mxu0 0
    %473 = vmatprep.subr.bf16.mxu0 0
    %474 = vmatpush2.bf16.msra.mxu0 0
    %475 = vmatprep.subr.bf16.mxu0 0
    %476 = vmatpush2.bf16.msra.mxu0 0
    %477 = vmatprep.subr.bf16.mxu0 0
    %478 = vmatpush2.bf16.msra.mxu0 0
    %479 = vmatprep.subr.bf16.mxu0 0
    %480 = vmatpush2.bf16.msra.mxu0 0
    %481 = vmatprep.subr.bf16.mxu0 0
    %482 = vmatpush2.bf16.msra.mxu0 0
    %483 = vmatprep.mubr.bf16.mxu0 0
    %484 = vmatmul.mubr.bf16.gmra.mxu0 %v354
    %v485 = vpop.f32.mrf.mxu0
    %v486 = vadd.f32 0.0, %v485
    %v487 = vpop.f32.mrf.mxu0
    %v488 = vadd.f32 0.0, %v487
    %v489 = vpop.f32.mrf.mxu0
    %v490 = vpop.f32.mrf.mxu0
    %491 = vdwg.mxu0
    %v492 = vadd.f32 %v351, %v486
    %v493 = vadd.f32 %v352, %v488
    %v494 = vxor.u32 %v492, 2147483648
    %v495 = vxor.u32 %v493, 2147483648
    %v496 = vmul.f32 %v494, 1.442695
    %v497 = vpow.pop %v496
    %v498 = vmul.f32 %v495, 1.442695
    %v499 = vpow.pop %v498
    %v500 = vadd.f32 %v497, 1.0
    %v501 = vadd.f32 %v499, 1.0
    %v502 = vrcp.pop %v500
    %v503 = vmul.f32 1.0, %v502
    %v504 = vrcp.pop %v501
    %v505 = vmul.f32 1.0, %v504
    %v506 = vmul.f32 %v505, %v346
    %v507 = vpack.c.bf16 %v506, %v506
    %v508 = vld [vmem:[#allocation9] sm:$0xf]
    %v509 = vld [vmem:[#allocation9 + $0x4] sm:$0xf]
    %v510 = vld [vmem:[#allocation9 + $0x8] sm:$0xf]
    %v511 = vld [vmem:[#allocation9 + $0xc] sm:$0xf]
    %v512 = vld [vmem:[#allocation9 + $0x10] sm:$0xf]
    %v513 = vld [vmem:[#allocation9 + $0x14] sm:$0xf]
    %v514 = vld [vmem:[#allocation9 + $0x18] sm:$0xf]
    %v515 = vld [vmem:[#allocation9 + $0x1c] sm:$0xf]
    %v516 = vld [vmem:[#allocation9 + $0x20] sm:$0xf]
    %v517 = vld [vmem:[#allocation9 + $0x24] sm:$0xf]
    %v518 = vld [vmem:[#allocation9 + $0x28] sm:$0xf]
    %v519 = vld [vmem:[#allocation9 + $0x2c] sm:$0xf]
    %v520 = vld [vmem:[#allocation9 + $0x30] sm:$0xf]
    %v521 = vld [vmem:[#allocation9 + $0x34] sm:$0xf]
    %v522 = vld [vmem:[#allocation9 + $0x38] sm:$0xf]
    %v523 = vld [vmem:[#allocation9 + $0x3c] sm:$0xf]
    %v540 = vunpack.c.l.b16 %v508
    %v541 = vunpack.c.l.b16 %v509
    %v542 = vunpack.c.l.b16 %v510
    %v543 = vunpack.c.l.b16 %v511
    %v544 = vunpack.c.l.b16 %v512
    %v545 = vunpack.c.l.b16 %v513
    %v546 = vunpack.c.l.b16 %v514
    %v547 = vunpack.c.l.b16 %v515
    %v548 = vunpack.c.l.b16 %v516
    %v549 = vunpack.c.l.b16 %v517
    %v550 = vunpack.c.l.b16 %v518
    %v551 = vunpack.c.l.b16 %v519
    %v552 = vunpack.c.l.b16 %v520
    %v553 = vunpack.c.l.b16 %v521
    %v554 = vunpack.c.l.b16 %v522
    %v555 = vunpack.c.l.b16 %v523
    %v556 = vpack.c.b16 %v541, %v540
    %v557 = vpack.c.b16 %v543, %v542
    %v558 = vpack.c.b16 %v545, %v544
    %v559 = vpack.c.b16 %v547, %v546
    %v560 = vpack.c.b16 %v549, %v548
    %v561 = vpack.c.b16 %v551, %v550
    %v562 = vpack.c.b16 %v553, %v552
    %v563 = vpack.c.b16 %v555, %v554
    %572 = vmatprep.subr.bf16.mxu0 0
    %573 = vmatpush1.bf16.msra.mxu0 %v563
    %574 = vmatprep.subr.bf16.mxu0 0
    %575 = vmatpush1.bf16.msra.mxu0 %v562
    %576 = vmatprep.subr.bf16.mxu0 0
    %577 = vmatpush1.bf16.msra.mxu0 %v561
    %578 = vmatprep.subr.bf16.mxu0 0
    %579 = vmatpush1.bf16.msra.mxu0 %v560
    %580 = vmatprep.subr.bf16.mxu0 0
    %581 = vmatpush1.bf16.msra.mxu0 %v559
    %582 = vmatprep.subr.bf16.mxu0 0
    %583 = vmatpush1.bf16.msra.mxu0 %v558
    %584 = vmatprep.subr.bf16.mxu0 0
    %585 = vmatpush1.bf16.msra.mxu0 %v557
    %586 = vmatprep.subr.bf16.mxu0 0
    %587 = vmatpush1.bf16.msra.mxu0 %v556
    %588 = vmatprep.subr.bf16.mxu0 0
    %589 = vmatpush2.bf16.msra.mxu0 0
    %590 = vmatprep.subr.bf16.mxu0 0
    %591 = vmatpush2.bf16.msra.mxu0 0
    %592 = vmatprep.subr.bf16.mxu0 0
    %593 = vmatpush2.bf16.msra.mxu0 0
    %594 = vmatprep.subr.bf16.mxu0 0
    %595 = vmatpush2.bf16.msra.mxu0 0
    %596 = vmatprep.subr.bf16.mxu0 0
    %597 = vmatpush2.bf16.msra.mxu0 0
    %598 = vmatprep.subr.bf16.mxu0 0
    %599 = vmatpush2.bf16.msra.mxu0 0
    %600 = vmatprep.subr.bf16.mxu0 0
    %601 = vmatpush2.bf16.msra.mxu0 0
    %602 = vmatprep.subr.bf16.mxu0 0
    %603 = vmatpush2.bf16.msra.mxu0 0
    %604 = vmatprep.mubr.bf16.mxu0 0
    %605 = vmatmul.mubr.bf16.gmra.mxu0 %v507
    %v606 = vpop.f32.mrf.mxu0
    %v607 = vadd.f32 0.0, %v606
    %v608 = vpop.f32.mrf.mxu0
    %v609 = vpop.f32.mrf.mxu0
    %v610 = vpop.f32.mrf.mxu0
    %611 = vdwg.mxu0
    %v612 = vadd.f32 %v353, %v607
    %v613 = vtanh.pop %v612
    %v614 = vsub.f32 %v346, %v613
    %v615 = vmul.f32 %v503, %v614
    %v616 = vadd.f32 %v613, %v615
    %s617 = scalar_lea.vmem [#allocation11], 8
    %618 = vst [vmem:[%s617] sm:$0xff] %v616
    %s619 = scalar_lea.vmem [#allocation3], 24
    %v620 = vld [vmem:[%s619] sm:$0xff]
    %v621 = vld [vmem:[%s619 + $0x8] sm:$0xf]
    %v622 = vunpack.c.l.bf16 %v620
    %v623 = vunpack.c.h.bf16 %v620
    %v624 = vunpack.c.l.bf16 %v621
    %v625 = vpack.c.bf16 %v616, %v616
    %v626 = vld [vmem:[#allocation8] sm:$0xff]
    %v627 = vld [vmem:[#allocation8 + $0x8] sm:$0xff]
    %v628 = vld [vmem:[#allocation8 + $0x10] sm:$0xff]
    %v629 = vld [vmem:[#allocation8 + $0x18] sm:$0xff]
    %v630 = vld [vmem:[#allocation8 + $0x20] sm:$0xff]
    %v631 = vld [vmem:[#allocation8 + $0x28] sm:$0xff]
    %v632 = vld [vmem:[#allocation8 + $0x30] sm:$0xff]
    %v633 = vld [vmem:[#allocation8 + $0x38] sm:$0xff]
    %v634 = vld [vmem:[#allocation8 + $0x40] sm:$0xff]
    %v635 = vld [vmem:[#allocation8 + $0x48] sm:$0xff]
    %v636 = vld [vmem:[#allocation8 + $0x50] sm:$0xff]
    %v637 = vld [vmem:[#allocation8 + $0x58] sm:$0xff]
    %v638 = vld [vmem:[#allocation8 + $0x60] sm:$0xff]
    %v639 = vld [vmem:[#allocation8 + $0x68] sm:$0xff]
    %v640 = vld [vmem:[#allocation8 + $0x70] sm:$0xff]
    %v641 = vld [vmem:[#allocation8 + $0x78] sm:$0xff]
    %v658 = vunpack.c.l.b16 %v626
    %v659 = vunpack.c.h.b16 %v626
    %v660 = vunpack.c.l.b16 %v627
    %v661 = vunpack.c.h.b16 %v627
    %v662 = vunpack.c.l.b16 %v628
    %v663 = vunpack.c.h.b16 %v628
    %v664 = vunpack.c.l.b16 %v629
    %v665 = vunpack.c.h.b16 %v629
    %v666 = vunpack.c.l.b16 %v630
    %v667 = vunpack.c.h.b16 %v630
    %v668 = vunpack.c.l.b16 %v631
    %v669 = vunpack.c.h.b16 %v631
    %v670 = vunpack.c.l.b16 %v632
    %v671 = vunpack.c.h.b16 %v632
    %v672 = vunpack.c.l.b16 %v633
    %v673 = vunpack.c.h.b16 %v633
    %v674 = vunpack.c.l.b16 %v634
    %v675 = vunpack.c.h.b16 %v634
    %v676 = vunpack.c.l.b16 %v635
    %v677 = vunpack.c.h.b16 %v635
    %v678 = vunpack.c.l.b16 %v636
    %v679 = vunpack.c.h.b16 %v636
    %v680 = vunpack.c.l.b16 %v637
    %v681 = vunpack.c.h.b16 %v637
    %v682 = vunpack.c.l.b16 %v638
    %v683 = vunpack.c.h.b16 %v638
    %v684 = vunpack.c.l.b16 %v639
    %v685 = vunpack.c.h.b16 %v639
    %v686 = vunpack.c.l.b16 %v640
    %v687 = vunpack.c.h.b16 %v640
    %v688 = vunpack.c.l.b16 %v641
    %v689 = vunpack.c.h.b16 %v641
    %v690 = vpack.c.b16 %v660, %v658
    %v691 = vpack.c.b16 %v661, %v659
    %v692 = vpack.c.b16 %v664, %v662
    %v693 = vpack.c.b16 %v665, %v663
    %v694 = vpack.c.b16 %v668, %v666
    %v695 = vpack.c.b16 %v669, %v667
    %v696 = vpack.c.b16 %v672, %v670
    %v697 = vpack.c.b16 %v673, %v671
    %v698 = vpack.c.b16 %v676, %v674
    %v699 = vpack.c.b16 %v677, %v675
    %v700 = vpack.c.b16 %v680, %v678
    %v701 = vpack.c.b16 %v681, %v679
    %v702 = vpack.c.b16 %v684, %v682
    %v703 = vpack.c.b16 %v685, %v683
    %v704 = vpack.c.b16 %v688, %v686
    %v705 = vpack.c.b16 %v689, %v687
    %722 = vmatprep.subr.bf16.mxu0 %v705
    %723 = vmatpush1.bf16.msra.mxu0 %v704
    %724 = vmatprep.subr.bf16.mxu0 %v703
    %725 = vmatpush1.bf16.msra.mxu0 %v702
    %726 = vmatprep.subr.bf16.mxu0 %v701
    %727 = vmatpush1.bf16.msra.mxu0 %v700
    %728 = vmatprep.subr.bf16.mxu0 %v699
    %729 = vmatpush1.bf16.msra.mxu0 %v698
    %730 = vmatprep.subr.bf16.mxu0 %v697
    %731 = vmatpush1.bf16.msra.mxu0 %v696
    %732 = vmatprep.subr.bf16.mxu0 %v695
    %733 = vmatpush1.bf16.msra.mxu0 %v694
    %734 = vmatprep.subr.bf16.mxu0 %v693
    %735 = vmatpush1.bf16.msra.mxu0 %v692
    %736 = vmatprep.subr.bf16.mxu0 %v691
    %737 = vmatpush1.bf16.msra.mxu0 %v690
    %738 = vmatprep.subr.bf16.mxu0 0
    %739 = vmatpush2.bf16.msra.mxu0 0
    %740 = vmatprep.subr.bf16.mxu0 0
    %741 = vmatpush2.bf16.msra.mxu0 0
    %742 = vmatprep.subr.bf16.mxu0 0
    %743 = vmatpush2.bf16.msra.mxu0 0
    %744 = vmatprep.subr.bf16.mxu0 0
    %745 = vmatpush2.bf16.msra.mxu0 0
    %746 = vmatprep.subr.bf16.mxu0 0
    %747 = vmatpush2.bf16.msra.mxu0 0
    %748 = vmatprep.subr.bf16.mxu0 0
    %749 = vmatpush2.bf16.msra.mxu0 0
    %750 = vmatprep.subr.bf16.mxu0 0
    %751 = vmatpush2.bf16.msra.mxu0 0
    %752 = vmatprep.subr.bf16.mxu0 0
    %753 = vmatpush2.bf16.msra.mxu0 0
    %754 = vmatprep.mubr.bf16.mxu0 0
    %755 = vmatmul.mubr.bf16.gmra.mxu0 %v625
    %v756 = vpop.f32.mrf.mxu0
    %v757 = vadd.f32 0.0, %v756
    %v758 = vpop.f32.mrf.mxu0
    %v759 = vadd.f32 0.0, %v758
    %v760 = vpop.f32.mrf.mxu0
    %v761 = vpop.f32.mrf.mxu0
    %762 = vdwg.mxu0
    %v763 = vadd.f32 %v622, %v757
    %v764 = vadd.f32 %v623, %v759
    %v765 = vxor.u32 %v763, 2147483648
    %v766 = vxor.u32 %v764, 2147483648
    %v767 = vmul.f32 %v765, 1.442695
    %v768 = vpow.pop %v767
    %v769 = vmul.f32 %v766, 1.442695
    %v770 = vpow.pop %v769
    %v771 = vadd.f32 %v768, 1.0
    %v772 = vadd.f32 %v770, 1.0
    %v773 = vrcp.pop %v771
    %v774 = vmul.f32 1.0, %v773
    %v775 = vrcp.pop %v772
    %v776 = vmul.f32 1.0, %v775
    %v777 = vmul.f32 %v776, %v616
    %v778 = vpack.c.bf16 %v777, %v777
    %v779 = vld [vmem:[#allocation9] sm:$0xf]
    %v780 = vld [vmem:[#allocation9 + $0x4] sm:$0xf]
    %v781 = vld [vmem:[#allocation9 + $0x8] sm:$0xf]
    %v782 = vld [vmem:[#allocation9 + $0xc] sm:$0xf]
    %v783 = vld [vmem:[#allocation9 + $0x10] sm:$0xf]
    %v784 = vld [vmem:[#allocation9 + $0x14] sm:$0xf]
    %v785 = vld [vmem:[#allocation9 + $0x18] sm:$0xf]
    %v786 = vld [vmem:[#allocation9 + $0x1c] sm:$0xf]
    %v787 = vld [vmem:[#allocation9 + $0x20] sm:$0xf]
    %v788 = vld [vmem:[#allocation9 + $0x24] sm:$0xf]
    %v789 = vld [vmem:[#allocation9 + $0x28] sm:$0xf]
    %v790 = vld [vmem:[#allocation9 + $0x2c] sm:$0xf]
    %v791 = vld [vmem:[#allocation9 + $0x30] sm:$0xf]
    %v792 = vld [vmem:[#allocation9 + $0x34] sm:$0xf]
    %v793 = vld [vmem:[#allocation9 + $0x38] sm:$0xf]
    %v794 = vld [vmem:[#allocation9 + $0x3c] sm:$0xf]
    %v811 = vunpack.c.l.b16 %v779
    %v812 = vunpack.c.l.b16 %v780
    %v813 = vunpack.c.l.b16 %v781
    %v814 = vunpack.c.l.b16 %v782
    %v815 = vunpack.c.l.b16 %v783
    %v816 = vunpack.c.l.b16 %v784
    %v817 = vunpack.c.l.b16 %v785
    %v818 = vunpack.c.l.b16 %v786
    %v819 = vunpack.c.l.b16 %v787
    %v820 = vunpack.c.l.b16 %v788
    %v821 = vunpack.c.l.b16 %v789
    %v822 = vunpack.c.l.b16 %v790
    %v823 = vunpack.c.l.b16 %v791
    %v824 = vunpack.c.l.b16 %v792
    %v825 = vunpack.c.l.b16 %v793
    %v826 = vunpack.c.l.b16 %v794
    %v827 = vpack.c.b16 %v812, %v811
    %v828 = vpack.c.b16 %v814, %v813
    %v829 = vpack.c.b16 %v816, %v815
    %v830 = vpack.c.b16 %v818, %v817
    %v831 = vpack.c.b16 %v820, %v819
    %v832 = vpack.c.b16 %v822, %v821
    %v833 = vpack.c.b16 %v824, %v823
    %v834 = vpack.c.b16 %v826, %v825
    %843 = vmatprep.subr.bf16.mxu0 0
    %844 = vmatpush1.bf16.msra.mxu0 %v834
    %845 = vmatprep.subr.bf16.mxu0 0
    %846 = vmatpush1.bf16.msra.mxu0 %v833
    %847 = vmatprep.subr.bf16.mxu0 0
    %848 = vmatpush1.bf16.msra.mxu0 %v832
    %849 = vmatprep.subr.bf16.mxu0 0
    %850 = vmatpush1.bf16.msra.mxu0 %v831
    %851 = vmatprep.subr.bf16.mxu0 0
    %852 = vmatpush1.bf16.msra.mxu0 %v830
    %853 = vmatprep.subr.bf16.mxu0 0
    %854 = vmatpush1.bf16.msra.mxu0 %v829
    %855 = vmatprep.subr.bf16.mxu0 0
    %856 = vmatpush1.bf16.msra.mxu0 %v828
    %857 = vmatprep.subr.bf16.mxu0 0
    %858 = vmatpush1.bf16.msra.mxu0 %v827
    %859 = vmatprep.subr.bf16.mxu0 0
    %860 = vmatpush2.bf16.msra.mxu0 0
    %861 = vmatprep.subr.bf16.mxu0 0
    %862 = vmatpush2.bf16.msra.mxu0 0
    %863 = vmatprep.subr.bf16.mxu0 0
    %864 = vmatpush2.bf16.msra.mxu0 0
    %865 = vmatprep.subr.bf16.mxu0 0
    %866 = vmatpush2.bf16.msra.mxu0 0
    %867 = vmatprep.subr.bf16.mxu0 0
    %868 = vmatpush2.bf16.msra.mxu0 0
    %869 = vmatprep.subr.bf16.mxu0 0
    %870 = vmatpush2.bf16.msra.mxu0 0
    %871 = vmatprep.subr.bf16.mxu0 0
    %872 = vmatpush2.bf16.msra.mxu0 0
    %873 = vmatprep.subr.bf16.mxu0 0
    %874 = vmatpush2.bf16.msra.mxu0 0
    %875 = vmatprep.mubr.bf16.mxu0 0
    %876 = vmatmul.mubr.bf16.gmra.mxu0 %v778
    %v877 = vpop.f32.mrf.mxu0
    %v878 = vadd.f32 0.0, %v877
    %v879 = vpop.f32.mrf.mxu0
    %v880 = vpop.f32.mrf.mxu0
    %v881 = vpop.f32.mrf.mxu0
    %882 = vdwg.mxu0
    %v883 = vadd.f32 %v624, %v878
    %v884 = vtanh.pop %v883
    %v885 = vsub.f32 %v616, %v884
    %v886 = vmul.f32 %v774, %v885
    %v887 = vadd.f32 %v884, %v886
    %s888 = scalar_lea.vmem [#allocation11], 16
    %889 = vst [vmem:[%s888] sm:$0xff] %v887
    %s890 = scalar_lea.vmem [#allocation3], 36
    %v891 = vld [vmem:[%s890] sm:$0xff]
    %v892 = vld [vmem:[%s890 + $0x8] sm:$0xf]
    %v893 = vunpack.c.l.bf16 %v891
    %v894 = vunpack.c.h.bf16 %v891
    %v895 = vunpack.c.l.bf16 %v892
    %v896 = vpack.c.bf16 %v887, %v887
    %v897 = vld [vmem:[#allocation8] sm:$0xff]
    %v898 = vld [vmem:[#allocation8 + $0x8] sm:$0xff]
    %v899 = vld [vmem:[#allocation8 + $0x10] sm:$0xff]
    %v900 = vld [vmem:[#allocation8 + $0x18] sm:$0xff]
    %v901 = vld [vmem:[#allocation8 + $0x20] sm:$0xff]
    %v902 = vld [vmem:[#allocation8 + $0x28] sm:$0xff]
    %v903 = vld [vmem:[#allocation8 + $0x30] sm:$0xff]
    %v904 = vld [vmem:[#allocation8 + $0x38] sm:$0xff]
    %v905 = vld [vmem:[#allocation8 + $0x40] sm:$0xff]
    %v906 = vld [vmem:[#allocation8 + $0x48] sm:$0xff]
    %v907 = vld [vmem:[#allocation8 + $0x50] sm:$0xff]
    %v908 = vld [vmem:[#allocation8 + $0x58] sm:$0xff]
    %v909 = vld [vmem:[#allocation8 + $0x60] sm:$0xff]
    %v910 = vld [vmem:[#allocation8 + $0x68] sm:$0xff]
    %v911 = vld [vmem:[#allocation8 + $0x70] sm:$0xff]
    %v912 = vld [vmem:[#allocation8 + $0x78] sm:$0xff]
    %v929 = vunpack.c.l.b16 %v897
    %v930 = vunpack.c.h.b16 %v897
    %v931 = vunpack.c.l.b16 %v898
    %v932 = vunpack.c.h.b16 %v898
    %v933 = vunpack.c.l.b16 %v899
    %v934 = vunpack.c.h.b16 %v899
    %v935 = vunpack.c.l.b16 %v900
    %v936 = vunpack.c.h.b16 %v900
    %v937 = vunpack.c.l.b16 %v901
    %v938 = vunpack.c.h.b16 %v901
    %v939 = vunpack.c.l.b16 %v902
    %v940 = vunpack.c.h.b16 %v902
    %v941 = vunpack.c.l.b16 %v903
    %v942 = vunpack.c.h.b16 %v903
    %v943 = vunpack.c.l.b16 %v904
    %v944 = vunpack.c.h.b16 %v904
    %v945 = vunpack.c.l.b16 %v905
    %v946 = vunpack.c.h.b16 %v905
    %v947 = vunpack.c.l.b16 %v906
    %v948 = vunpack.c.h.b16 %v906
    %v949 = vunpack.c.l.b16 %v907
    %v950 = vunpack.c.h.b16 %v907
    %v951 = vunpack.c.l.b16 %v908
    %v952 = vunpack.c.h.b16 %v908
    %v953 = vunpack.c.l.b16 %v909
    %v954 = vunpack.c.h.b16 %v909
    %v955 = vunpack.c.l.b16 %v910
    %v956 = vunpack.c.h.b16 %v910
    %v957 = vunpack.c.l.b16 %v911
    %v958 = vunpack.c.h.b16 %v911
    %v959 = vunpack.c.l.b16 %v912
    %v960 = vunpack.c.h.b16 %v912
    %v961 = vpack.c.b16 %v931, %v929
    %v962 = vpack.c.b16 %v932, %v930
    %v963 = vpack.c.b16 %v935, %v933
    %v964 = vpack.c.b16 %v936, %v934
    %v965 = vpack.c.b16 %v939, %v937
    %v966 = vpack.c.b16 %v940, %v938
    %v967 = vpack.c.b16 %v943, %v941
    %v968 = vpack.c.b16 %v944, %v942
    %v969 = vpack.c.b16 %v947, %v945
    %v970 = vpack.c.b16 %v948, %v946
    %v971 = vpack.c.b16 %v951, %v949
    %v972 = vpack.c.b16 %v952, %v950
    %v973 = vpack.c.b16 %v955, %v953
    %v974 = vpack.c.b16 %v956, %v954
    %v975 = vpack.c.b16 %v959, %v957
    %v976 = vpack.c.b16 %v960, %v958
    %993 = vmatprep.subr.bf16.mxu0 %v976
    %994 = vmatpush1.bf16.msra.mxu0 %v975
    %995 = vmatprep.subr.bf16.mxu0 %v974
    %996 = vmatpush1.bf16.msra.mxu0 %v973
    %997 = vmatprep.subr.bf16.mxu0 %v972
    %998 = vmatpush1.bf16.msra.mxu0 %v971
    %999 = vmatprep.subr.bf16.mxu0 %v970
    %1000 = vmatpush1.bf16.msra.mxu0 %v969
    %1001 = vmatprep.subr.bf16.mxu0 %v968
    %1002 = vmatpush1.bf16.msra.mxu0 %v967
    %1003 = vmatprep.subr.bf16.mxu0 %v966
    %1004 = vmatpush1.bf16.msra.mxu0 %v965
    %1005 = vmatprep.subr.bf16.mxu0 %v964
    %1006 = vmatpush1.bf16.msra.mxu0 %v963
    %1007 = vmatprep.subr.bf16.mxu0 %v962
    %1008 = vmatpush1.bf16.msra.mxu0 %v961
    %1009 = vmatprep.subr.bf16.mxu0 0
    %1010 = vmatpush2.bf16.msra.mxu0 0
    %1011 = vmatprep.subr.bf16.mxu0 0
    %1012 = vmatpush2.bf16.msra.mxu0 0
    %1013 = vmatprep.subr.bf16.mxu0 0
    %1014 = vmatpush2.bf16.msra.mxu0 0
    %1015 = vmatprep.subr.bf16.mxu0 0
    %1016 = vmatpush2.bf16.msra.mxu0 0
    %1017 = vmatprep.subr.bf16.mxu0 0
    %1018 = vmatpush2.bf16.msra.mxu0 0
    %1019 = vmatprep.subr.bf16.mxu0 0
    %1020 = vmatpush2.bf16.msra.mxu0 0
    %1021 = vmatprep.subr.bf16.mxu0 0
    %1022 = vmatpush2.bf16.msra.mxu0 0
    %1023 = vmatprep.subr.bf16.mxu0 0
    %1024 = vmatpush2.bf16.msra.mxu0 0
    %1025 = vmatprep.mubr.bf16.mxu0 0
    %1026 = vmatmul.mubr.bf16.gmra.mxu0 %v896
    %v1027 = vpop.f32.mrf.mxu0
    %v1028 = vadd.f32 0.0, %v1027
    %v1029 = vpop.f32.mrf.mxu0
    %v1030 = vadd.f32 0.0, %v1029
    %v1031 = vpop.f32.mrf.mxu0
    %v1032 = vpop.f32.mrf.mxu0
    %1033 = vdwg.mxu0
    %v1034 = vadd.f32 %v893, %v1028
    %v1035 = vadd.f32 %v894, %v1030
    %v1036 = vxor.u32 %v1034, 2147483648
    %v1037 = vxor.u32 %v1035, 2147483648
    %v1038 = vmul.f32 %v1036, 1.442695
    %v1039 = vpow.pop %v1038
    %v1040 = vmul.f32 %v1037, 1.442695
    %v1041 = vpow.pop %v1040
    %v1042 = vadd.f32 %v1039, 1.0
    %v1043 = vadd.f32 %v1041, 1.0
    %v1044 = vrcp.pop %v1042
    %v1045 = vmul.f32 1.0, %v1044
    %v1046 = vrcp.pop %v1043
    %v1047 = vmul.f32 1.0, %v1046
    %v1048 = vmul.f32 %v1047, %v887
    %v1049 = vpack.c.bf16 %v1048, %v1048
    %v1050 = vld [vmem:[#allocation9] sm:$0xf]
    %v1051 = vld [vmem:[#allocation9 + $0x4] sm:$0xf]
    %v1052 = vld [vmem:[#allocation9 + $0x8] sm:$0xf]
    %v1053 = vld [vmem:[#allocation9 + $0xc] sm:$0xf]
    %v1054 = vld [vmem:[#allocation9 + $0x10] sm:$0xf]
    %v1055 = vld [vmem:[#allocation9 + $0x14] sm:$0xf]
    %v1056 = vld [vmem:[#allocation9 + $0x18] sm:$0xf]
    %v1057 = vld [vmem:[#allocation9 + $0x1c] sm:$0xf]
    %v1058 = vld [vmem:[#allocation9 + $0x20] sm:$0xf]
    %v1059 = vld [vmem:[#allocation9 + $0x24] sm:$0xf]
    %v1060 = vld [vmem:[#allocation9 + $0x28] sm:$0xf]
    %v1061 = vld [vmem:[#allocation9 + $0x2c] sm:$0xf]
    %v1062 = vld [vmem:[#allocation9 + $0x30] sm:$0xf]
    %v1063 = vld [vmem:[#allocation9 + $0x34] sm:$0xf]
    %v1064 = vld [vmem:[#allocation9 + $0x38] sm:$0xf]
    %v1065 = vld [vmem:[#allocation9 + $0x3c] sm:$0xf]
    %v1082 = vunpack.c.l.b16 %v1050
    %v1083 = vunpack.c.l.b16 %v1051
    %v1084 = vunpack.c.l.b16 %v1052
    %v1085 = vunpack.c.l.b16 %v1053
    %v1086 = vunpack.c.l.b16 %v1054
    %v1087 = vunpack.c.l.b16 %v1055
    %v1088 = vunpack.c.l.b16 %v1056
    %v1089 = vunpack.c.l.b16 %v1057
    %v1090 = vunpack.c.l.b16 %v1058
    %v1091 = vunpack.c.l.b16 %v1059
    %v1092 = vunpack.c.l.b16 %v1060
    %v1093 = vunpack.c.l.b16 %v1061
    %v1094 = vunpack.c.l.b16 %v1062
    %v1095 = vunpack.c.l.b16 %v1063
    %v1096 = vunpack.c.l.b16 %v1064
    %v1097 = vunpack.c.l.b16 %v1065
    %v1098 = vpack.c.b16 %v1083, %v1082
    %v1099 = vpack.c.b16 %v1085, %v1084
    %v1100 = vpack.c.b16 %v1087, %v1086
    %v1101 = vpack.c.b16 %v1089, %v1088
    %v1102 = vpack.c.b16 %v1091, %v1090
    %v1103 = vpack.c.b16 %v1093, %v1092
    %v1104 = vpack.c.b16 %v1095, %v1094
    %v1105 = vpack.c.b16 %v1097, %v1096
    %1114 = vmatprep.subr.bf16.mxu0 0
    %1115 = vmatpush1.bf16.msra.mxu0 %v1105
    %1116 = vmatprep.subr.bf16.mxu0 0
    %1117 = vmatpush1.bf16.msra.mxu0 %v1104
    %1118 = vmatprep.subr.bf16.mxu0 0
    %1119 = vmatpush1.bf16.msra.mxu0 %v1103
    %1120 = vmatprep.subr.bf16.mxu0 0
    %1121 = vmatpush1.bf16.msra.mxu0 %v1102
    %1122 = vmatprep.subr.bf16.mxu0 0
    %1123 = vmatpush1.bf16.msra.mxu0 %v1101
    %1124 = vmatprep.subr.bf16.mxu0 0
    %1125 = vmatpush1.bf16.msra.mxu0 %v1100
    %1126 = vmatprep.subr.bf16.mxu0 0
    %1127 = vmatpush1.bf16.msra.mxu0 %v1099
    %1128 = vmatprep.subr.bf16.mxu0 0
    %1129 = vmatpush1.bf16.msra.mxu0 %v1098
    %1130 = vmatprep.subr.bf16.mxu0 0
    %1131 = vmatpush2.bf16.msra.mxu0 0
    %1132 = vmatprep.subr.bf16.mxu0 0
    %1133 = vmatpush2.bf16.msra.mxu0 0
    %1134 = vmatprep.subr.bf16.mxu0 0
    %1135 = vmatpush2.bf16.msra.mxu0 0
    %1136 = vmatprep.subr.bf16.mxu0 0
    %1137 = vmatpush2.bf16.msra.mxu0 0
    %1138 = vmatprep.subr.bf16.mxu0 0
    %1139 = vmatpush2.bf16.msra.mxu0 0
    %1140 = vmatprep.subr.bf16.mxu0 0
    %1141 = vmatpush2.bf16.msra.mxu0 0
    %1142 = vmatprep.subr.bf16.mxu0 0
    %1143 = vmatpush2.bf16.msra.mxu0 0
    %1144 = vmatprep.subr.bf16.mxu0 0
    %1145 = vmatpush2.bf16.msra.mxu0 0
    %1146 = vmatprep.mubr.bf16.mxu0 0
    %1147 = vmatmul.mubr.bf16.gmra.mxu0 %v1049
    %v1148 = vpop.f32.mrf.mxu0
    %v1149 = vadd.f32 0.0, %v1148
    %v1150 = vpop.f32.mrf.mxu0
    %v1151 = vpop.f32.mrf.mxu0
    %v1152 = vpop.f32.mrf.mxu0
    %1153 = vdwg.mxu0
    %v1154 = vadd.f32 %v895, %v1149
    %v1155 = vtanh.pop %v1154
    %v1156 = vsub.f32 %v887, %v1155
    %v1157 = vmul.f32 %v1045, %v1156
    %v1158 = vadd.f32 %v1155, %v1157
    %s1159 = scalar_lea.vmem [#allocation11], 24
    %1160 = vst [vmem:[%s1159] sm:$0xff] %v1158
    %s1161 = scalar_lea.vmem [#allocation3], 48
    %v1162 = vld [vmem:[%s1161] sm:$0xff]
    %v1163 = vld [vmem:[%s1161 + $0x8] sm:$0xf]
    %v1164 = vunpack.c.l.bf16 %v1162
    %v1165 = vunpack.c.h.bf16 %v1162
    %v1166 = vunpack.c.l.bf16 %v1163
    %v1167 = vpack.c.bf16 %v1158, %v1158
    %v1168 = vld [vmem:[#allocation8] sm:$0xff]
    %v1169 = vld [vmem:[#allocation8 + $0x8] sm:$0xff]
    %v1170 = vld [vmem:[#allocation8 + $0x10] sm:$0xff]
    %v1171 = vld [vmem:[#allocation8 + $0x18] sm:$0xff]
    %v1172 = vld [vmem:[#allocation8 + $0x20] sm:$0xff]
    %v1173 = vld [vmem:[#allocation8 + $0x28] sm:$0xff]
    %v1174 = vld [vmem:[#allocation8 + $0x30] sm:$0xff]
    %v1175 = vld [vmem:[#allocation8 + $0x38] sm:$0xff]
    %v1176 = vld [vmem:[#allocation8 + $0x40] sm:$0xff]
    %v1177 = vld [vmem:[#allocation8 + $0x48] sm:$0xff]
    %v1178 = vld [vmem:[#allocation8 + $0x50] sm:$0xff]
    %v1179 = vld [vmem:[#allocation8 + $0x58] sm:$0xff]
    %v1180 = vld [vmem:[#allocation8 + $0x60] sm:$0xff]
    %v1181 = vld [vmem:[#allocation8 + $0x68] sm:$0xff]
    %v1182 = vld [vmem:[#allocation8 + $0x70] sm:$0xff]
    %v1183 = vld [vmem:[#allocation8 + $0x78] sm:$0xff]
    %v1200 = vunpack.c.l.b16 %v1168
    %v1201 = vunpack.c.h.b16 %v1168
    %v1202 = vunpack.c.l.b16 %v1169
    %v1203 = vunpack.c.h.b16 %v1169
    %v1204 = vunpack.c.l.b16 %v1170
    %v1205 = vunpack.c.h.b16 %v1170
    %v1206 = vunpack.c.l.b16 %v1171
    %v1207 = vunpack.c.h.b16 %v1171
    %v1208 = vunpack.c.l.b16 %v1172
    %v1209 = vunpack.c.h.b16 %v1172
    %v1210 = vunpack.c.l.b16 %v1173
    %v1211 = vunpack.c.h.b16 %v1173
    %v1212 = vunpack.c.l.b16 %v1174
    %v1213 = vunpack.c.h.b16 %v1174
    %v1214 = vunpack.c.l.b16 %v1175
    %v1215 = vunpack.c.h.b16 %v1175
    %v1216 = vunpack.c.l.b16 %v1176
    %v1217 = vunpack.c.h.b16 %v1176
    %v1218 = vunpack.c.l.b16 %v1177
    %v1219 = vunpack.c.h.b16 %v1177
    %v1220 = vunpack.c.l.b16 %v1178
    %v1221 = vunpack.c.h.b16 %v1178
    %v1222 = vunpack.c.l.b16 %v1179
    %v1223 = vunpack.c.h.b16 %v1179
    %v1224 = vunpack.c.l.b16 %v1180
    %v1225 = vunpack.c.h.b16 %v1180
    %v1226 = vunpack.c.l.b16 %v1181
    %v1227 = vunpack.c.h.b16 %v1181
    %v1228 = vunpack.c.l.b16 %v1182
    %v1229 = vunpack.c.h.b16 %v1182
    %v1230 = vunpack.c.l.b16 %v1183
    %v1231 = vunpack.c.h.b16 %v1183
    %v1232 = vpack.c.b16 %v1202, %v1200
    %v1233 = vpack.c.b16 %v1203, %v1201
    %v1234 = vpack.c.b16 %v1206, %v1204
    %v1235 = vpack.c.b16 %v1207, %v1205
    %v1236 = vpack.c.b16 %v1210, %v1208
    %v1237 = vpack.c.b16 %v1211, %v1209
    %v1238 = vpack.c.b16 %v1214, %v1212
    %v1239 = vpack.c.b16 %v1215, %v1213
    %v1240 = vpack.c.b16 %v1218, %v1216
    %v1241 = vpack.c.b16 %v1219, %v1217
    %v1242 = vpack.c.b16 %v1222, %v1220
    %v1243 = vpack.c.b16 %v1223, %v1221
    %v1244 = vpack.c.b16 %v1226, %v1224
    %v1245 = vpack.c.b16 %v1227, %v1225
    %v1246 = vpack.c.b16 %v1230, %v1228
    %v1247 = vpack.c.b16 %v1231, %v1229
    %1264 = vmatprep.subr.bf16.mxu0 %v1247
    %1265 = vmatpush1.bf16.msra.mxu0 %v1246
    %1266 = vmatprep.subr.bf16.mxu0 %v1245
    %1267 = vmatpush1.bf16.msra.mxu0 %v1244
    %1268 = vmatprep.subr.bf16.mxu0 %v1243
    %1269 = vmatpush1.bf16.msra.mxu0 %v1242
    %1270 = vmatprep.subr.bf16.mxu0 %v1241
    %1271 = vmatpush1.bf16.msra.mxu0 %v1240
    %1272 = vmatprep.subr.bf16.mxu0 %v1239
    %1273 = vmatpush1.bf16.msra.mxu0 %v1238
    %1274 = vmatprep.subr.bf16.mxu0 %v1237
    %1275 = vmatpush1.bf16.msra.mxu0 %v1236
    %1276 = vmatprep.subr.bf16.mxu0 %v1235
    %1277 = vmatpush1.bf16.msra.mxu0 %v1234
    %1278 = vmatprep.subr.bf16.mxu0 %v1233
    %1279 = vmatpush1.bf16.msra.mxu0 %v1232
    %1280 = vmatprep.subr.bf16.mxu0 0
    %1281 = vmatpush2.bf16.msra.mxu0 0
    %1282 = vmatprep.subr.bf16.mxu0 0
    %1283 = vmatpush2.bf16.msra.mxu0 0
    %1284 = vmatprep.subr.bf16.mxu0 0
    %1285 = vmatpush2.bf16.msra.mxu0 0
    %1286 = vmatprep.subr.bf16.mxu0 0
    %1287 = vmatpush2.bf16.msra.mxu0 0
    %1288 = vmatprep.subr.bf16.mxu0 0
    %1289 = vmatpush2.bf16.msra.mxu0 0
    %1290 = vmatprep.subr.bf16.mxu0 0
    %1291 = vmatpush2.bf16.msra.mxu0 0
    %1292 = vmatprep.subr.bf16.mxu0 0
    %1293 = vmatpush2.bf16.msra.mxu0 0
    %1294 = vmatprep.subr.bf16.mxu0 0
    %1295 = vmatpush2.bf16.msra.mxu0 0
    %1296 = vmatprep.mubr.bf16.mxu0 0
    %1297 = vmatmul.mubr.bf16.gmra.mxu0 %v1167
    %v1298 = vpop.f32.mrf.mxu0
    %v1299 = vadd.f32 0.0, %v1298
    %v1300 = vpop.f32.mrf.mxu0
    %v1301 = vadd.f32 0.0, %v1300
    %v1302 = vpop.f32.mrf.mxu0
    %v1303 = vpop.f32.mrf.mxu0
    %1304 = vdwg.mxu0
    %v1305 = vadd.f32 %v1164, %v1299
    %v1306 = vadd.f32 %v1165, %v1301
    %v1307 = vxor.u32 %v1305, 2147483648
    %v1308 = vxor.u32 %v1306, 2147483648
    %v1309 = vmul.f32 %v1307, 1.442695
    %v1310 = vpow.pop %v1309
    %v1311 = vmul.f32 %v1308, 1.442695
    %v1312 = vpow.pop %v1311
    %v1313 = vadd.f32 %v1310, 1.0
    %v1314 = vadd.f32 %v1312, 1.0
    %v1315 = vrcp.pop %v1313
    %v1316 = vmul.f32 1.0, %v1315
    %v1317 = vrcp.pop %v1314
    %v1318 = vmul.f32 1.0, %v1317
    %v1319 = vmul.f32 %v1318, %v1158
    %v1320 = vpack.c.bf16 %v1319, %v1319
    %v1321 = vld [vmem:[#allocation9] sm:$0xf]
    %v1322 = vld [vmem:[#allocation9 + $0x4] sm:$0xf]
    %v1323 = vld [vmem:[#allocation9 + $0x8] sm:$0xf]
    %v1324 = vld [vmem:[#allocation9 + $0xc] sm:$0xf]
    %v1325 = vld [vmem:[#allocation9 + $0x10] sm:$0xf]
    %v1326 = vld [vmem:[#allocation9 + $0x14] sm:$0xf]
    %v1327 = vld [vmem:[#allocation9 + $0x18] sm:$0xf]
    %v1328 = vld [vmem:[#allocation9 + $0x1c] sm:$0xf]
    %v1329 = vld [vmem:[#allocation9 + $0x20] sm:$0xf]
    %v1330 = vld [vmem:[#allocation9 + $0x24] sm:$0xf]
    %v1331 = vld [vmem:[#allocation9 + $0x28] sm:$0xf]
    %v1332 = vld [vmem:[#allocation9 + $0x2c] sm:$0xf]
    %v1333 = vld [vmem:[#allocation9 + $0x30] sm:$0xf]
    %v1334 = vld [vmem:[#allocation9 + $0x34] sm:$0xf]
    %v1335 = vld [vmem:[#allocation9 + $0x38] sm:$0xf]
    %v1336 = vld [vmem:[#allocation9 + $0x3c] sm:$0xf]
    %v1353 = vunpack.c.l.b16 %v1321
    %v1354 = vunpack.c.l.b16 %v1322
    %v1355 = vunpack.c.l.b16 %v1323
    %v1356 = vunpack.c.l.b16 %v1324
    %v1357 = vunpack.c.l.b16 %v1325
    %v1358 = vunpack.c.l.b16 %v1326
    %v1359 = vunpack.c.l.b16 %v1327
    %v1360 = vunpack.c.l.b16 %v1328
    %v1361 = vunpack.c.l.b16 %v1329
    %v1362 = vunpack.c.l.b16 %v1330
    %v1363 = vunpack.c.l.b16 %v1331
    %v1364 = vunpack.c.l.b16 %v1332
    %v1365 = vunpack.c.l.b16 %v1333
    %v1366 = vunpack.c.l.b16 %v1334
    %v1367 = vunpack.c.l.b16 %v1335
    %v1368 = vunpack.c.l.b16 %v1336
    %v1369 = vpack.c.b16 %v1354, %v1353
    %v1370 = vpack.c.b16 %v1356, %v1355
    %v1371 = vpack.c.b16 %v1358, %v1357
    %v1372 = vpack.c.b16 %v1360, %v1359
    %v1373 = vpack.c.b16 %v1362, %v1361
    %v1374 = vpack.c.b16 %v1364, %v1363
    %v1375 = vpack.c.b16 %v1366, %v1365
    %v1376 = vpack.c.b16 %v1368, %v1367
    %1385 = vmatprep.subr.bf16.mxu0 0
    %1386 = vmatpush1.bf16.msra.mxu0 %v1376
    %1387 = vmatprep.subr.bf16.mxu0 0
    %1388 = vmatpush1.bf16.msra.mxu0 %v1375
    %1389 = vmatprep.subr.bf16.mxu0 0
    %1390 = vmatpush1.bf16.msra.mxu0 %v1374
    %1391 = vmatprep.subr.bf16.mxu0 0
    %1392 = vmatpush1.bf16.msra.mxu0 %v1373
    %1393 = vmatprep.subr.bf16.mxu0 0
    %1394 = vmatpush1.bf16.msra.mxu0 %v1372
    %1395 = vmatprep.subr.bf16.mxu0 0
    %1396 = vmatpush1.bf16.msra.mxu0 %v1371
    %1397 = vmatprep.subr.bf16.mxu0 0
    %1398 = vmatpush1.bf16.msra.mxu0 %v1370
    %1399 = vmatprep.subr.bf16.mxu0 0
    %1400 = vmatpush1.bf16.msra.mxu0 %v1369
    %1401 = vmatprep.subr.bf16.mxu0 0
    %1402 = vmatpush2.bf16.msra.mxu0 0
    %1403 = vmatprep.subr.bf16.mxu0 0
    %1404 = vmatpush2.bf16.msra.mxu0 0
    %1405 = vmatprep.subr.bf16.mxu0 0
    %1406 = vmatpush2.bf16.msra.mxu0 0
    %1407 = vmatprep.subr.bf16.mxu0 0
    %1408 = vmatpush2.bf16.msra.mxu0 0
    %1409 = vmatprep.subr.bf16.mxu0 0
    %1410 = vmatpush2.bf16.msra.mxu0 0
    %1411 = vmatprep.subr.bf16.mxu0 0
    %1412 = vmatpush2.bf16.msra.mxu0 0
    %1413 = vmatprep.subr.bf16.mxu0 0
    %1414 = vmatpush2.bf16.msra.mxu0 0
    %1415 = vmatprep.subr.bf16.mxu0 0
    %1416 = vmatpush2.bf16.msra.mxu0 0
    %1417 = vmatprep.mubr.bf16.mxu0 0
    %1418 = vmatmul.mubr.bf16.gmra.mxu0 %v1320
    %v1419 = vpop.f32.mrf.mxu0
    %v1420 = vadd.f32 0.0, %v1419
    %v1421 = vpop.f32.mrf.mxu0
    %v1422 = vpop.f32.mrf.mxu0
    %v1423 = vpop.f32.mrf.mxu0
    %1424 = vdwg.mxu0
    %v1425 = vadd.f32 %v1166, %v1420
    %v1426 = vtanh.pop %v1425
    %v1427 = vsub.f32 %v1158, %v1426
    %v1428 = vmul.f32 %v1316, %v1427
    %v1429 = vadd.f32 %v1426, %v1428
    %s1430 = scalar_lea.vmem [#allocation11], 32
    %1431 = vst [vmem:[%s1430] sm:$0xff] %v1429
    %s1432 = scalar_lea.vmem [#allocation3], 60
    %v1433 = vld [vmem:[%s1432] sm:$0xff]
    %v1434 = vld [vmem:[%s1432 + $0x8] sm:$0xf]
    %v1435 = vunpack.c.l.bf16 %v1433
    %v1436 = vunpack.c.h.bf16 %v1433
    %v1437 = vunpack.c.l.bf16 %v1434
    %v1438 = vpack.c.bf16 %v1429, %v1429
    %v1439 = vld [vmem:[#allocation8] sm:$0xff]
    %v1440 = vld [vmem:[#allocation8 + $0x8] sm:$0xff]
    %v1441 = vld [vmem:[#allocation8 + $0x10] sm:$0xff]
    %v1442 = vld [vmem:[#allocation8 + $0x18] sm:$0xff]
    %v1443 = vld [vmem:[#allocation8 + $0x20] sm:$0xff]
    %v1444 = vld [vmem:[#allocation8 + $0x28] sm:$0xff]
    %v1445 = vld [vmem:[#allocation8 + $0x30] sm:$0xff]
    %v1446 = vld [vmem:[#allocation8 + $0x38] sm:$0xff]
    %v1447 = vld [vmem:[#allocation8 + $0x40] sm:$0xff]
    %v1448 = vld [vmem:[#allocation8 + $0x48] sm:$0xff]
    %v1449 = vld [vmem:[#allocation8 + $0x50] sm:$0xff]
    %v1450 = vld [vmem:[#allocation8 + $0x58] sm:$0xff]
    %v1451 = vld [vmem:[#allocation8 + $0x60] sm:$0xff]
    %v1452 = vld [vmem:[#allocation8 + $0x68] sm:$0xff]
    %v1453 = vld [vmem:[#allocation8 + $0x70] sm:$0xff]
    %v1454 = vld [vmem:[#allocation8 + $0x78] sm:$0xff]
    %v1471 = vunpack.c.l.b16 %v1439
    %v1472 = vunpack.c.h.b16 %v1439
    %v1473 = vunpack.c.l.b16 %v1440
    %v1474 = vunpack.c.h.b16 %v1440
    %v1475 = vunpack.c.l.b16 %v1441
    %v1476 = vunpack.c.h.b16 %v1441
    %v1477 = vunpack.c.l.b16 %v1442
    %v1478 = vunpack.c.h.b16 %v1442
    %v1479 = vunpack.c.l.b16 %v1443
    %v1480 = vunpack.c.h.b16 %v1443
    %v1481 = vunpack.c.l.b16 %v1444
    %v1482 = vunpack.c.h.b16 %v1444
    %v1483 = vunpack.c.l.b16 %v1445
    %v1484 = vunpack.c.h.b16 %v1445
    %v1485 = vunpack.c.l.b16 %v1446
    %v1486 = vunpack.c.h.b16 %v1446
    %v1487 = vunpack.c.l.b16 %v1447
    %v1488 = vunpack.c.h.b16 %v1447
    %v1489 = vunpack.c.l.b16 %v1448
    %v1490 = vunpack.c.h.b16 %v1448
    %v1491 = vunpack.c.l.b16 %v1449
    %v1492 = vunpack.c.h.b16 %v1449
    %v1493 = vunpack.c.l.b16 %v1450
    %v1494 = vunpack.c.h.b16 %v1450
    %v1495 = vunpack.c.l.b16 %v1451
    %v1496 = vunpack.c.h.b16 %v1451
    %v1497 = vunpack.c.l.b16 %v1452
    %v1498 = vunpack.c.h.b16 %v1452
    %v1499 = vunpack.c.l.b16 %v1453
    %v1500 = vunpack.c.h.b16 %v1453
    %v1501 = vunpack.c.l.b16 %v1454
    %v1502 = vunpack.c.h.b16 %v1454
    %v1503 = vpack.c.b16 %v1473, %v1471
    %v1504 = vpack.c.b16 %v1474, %v1472
    %v1505 = vpack.c.b16 %v1477, %v1475
    %v1506 = vpack.c.b16 %v1478, %v1476
    %v1507 = vpack.c.b16 %v1481, %v1479
    %v1508 = vpack.c.b16 %v1482, %v1480
    %v1509 = vpack.c.b16 %v1485, %v1483
    %v1510 = vpack.c.b16 %v1486, %v1484
    %v1511 = vpack.c.b16 %v1489, %v1487
    %v1512 = vpack.c.b16 %v1490, %v1488
    %v1513 = vpack.c.b16 %v1493, %v1491
    %v1514 = vpack.c.b16 %v1494, %v1492
    %v1515 = vpack.c.b16 %v1497, %v1495
    %v1516 = vpack.c.b16 %v1498, %v1496
    %v1517 = vpack.c.b16 %v1501, %v1499
    %v1518 = vpack.c.b16 %v1502, %v1500
    %1535 = vmatprep.subr.bf16.mxu0 %v1518
    %1536 = vmatpush1.bf16.msra.mxu0 %v1517
    %1537 = vmatprep.subr.bf16.mxu0 %v1516
    %1538 = vmatpush1.bf16.msra.mxu0 %v1515
    %1539 = vmatprep.subr.bf16.mxu0 %v1514
    %1540 = vmatpush1.bf16.msra.mxu0 %v1513
    %1541 = vmatprep.subr.bf16.mxu0 %v1512
    %1542 = vmatpush1.bf16.msra.mxu0 %v1511
    %1543 = vmatprep.subr.bf16.mxu0 %v1510
    %1544 = vmatpush1.bf16.msra.mxu0 %v1509
    %1545 = vmatprep.subr.bf16.mxu0 %v1508
    %1546 = vmatpush1.bf16.msra.mxu0 %v1507
    %1547 = vmatprep.subr.bf16.mxu0 %v1506
    %1548 = vmatpush1.bf16.msra.mxu0 %v1505
    %1549 = vmatprep.subr.bf16.mxu0 %v1504
    %1550 = vmatpush1.bf16.msra.mxu0 %v1503
    %1551 = vmatprep.subr.bf16.mxu0 0
    %1552 = vmatpush2.bf16.msra.mxu0 0
    %1553 = vmatprep.subr.bf16.mxu0 0
    %1554 = vmatpush2.bf16.msra.mxu0 0
    %1555 = vmatprep.subr.bf16.mxu0 0
    %1556 = vmatpush2.bf16.msra.mxu0 0
    %1557 = vmatprep.subr.bf16.mxu0 0
    %1558 = vmatpush2.bf16.msra.mxu0 0
    %1559 = vmatprep.subr.bf16.mxu0 0
    %1560 = vmatpush2.bf16.msra.mxu0 0
    %1561 = vmatprep.subr.bf16.mxu0 0
    %1562 = vmatpush2.bf16.msra.mxu0 0
    %1563 = vmatprep.subr.bf16.mxu0 0
    %1564 = vmatpush2.bf16.msra.mxu0 0
    %1565 = vmatprep.subr.bf16.mxu0 0
    %1566 = vmatpush2.bf16.msra.mxu0 0
    %1567 = vmatprep.mubr.bf16.mxu0 0
    %1568 = vmatmul.mubr.bf16.gmra.mxu0 %v1438
    %v1569 = vpop.f32.mrf.mxu0
    %v1570 = vadd.f32 0.0, %v1569
    %v1571 = vpop.f32.mrf.mxu0
    %v1572 = vadd.f32 0.0, %v1571
    %v1573 = vpop.f32.mrf.mxu0
    %v1574 = vpop.f32.mrf.mxu0
    %1575 = vdwg.mxu0
    %v1576 = vadd.f32 %v1435, %v1570
    %v1577 = vadd.f32 %v1436, %v1572
    %v1578 = vxor.u32 %v1576, 2147483648
    %v1579 = vxor.u32 %v1577, 2147483648
    %v1580 = vmul.f32 %v1578, 1.442695
    %v1581 = vpow.pop %v1580
    %v1582 = vmul.f32 %v1579, 1.442695
    %v1583 = vpow.pop %v1582
    %v1584 = vadd.f32 %v1581, 1.0
    %v1585 = vadd.f32 %v1583, 1.0
    %v1586 = vrcp.pop %v1584
    %v1587 = vmul.f32 1.0, %v1586
    %v1588 = vrcp.pop %v1585
    %v1589 = vmul.f32 1.0, %v1588
    %v1590 = vmul.f32 %v1589, %v1429
    %v1591 = vpack.c.bf16 %v1590, %v1590
    %v1592 = vld [vmem:[#allocation9] sm:$0xf]
    %v1593 = vld [vmem:[#allocation9 + $0x4] sm:$0xf]
    %v1594 = vld [vmem:[#allocation9 + $0x8] sm:$0xf]
    %v1595 = vld [vmem:[#allocation9 + $0xc] sm:$0xf]
    %v1596 = vld [vmem:[#allocation9 + $0x10] sm:$0xf]
    %v1597 = vld [vmem:[#allocation9 + $0x14] sm:$0xf]
    %v1598 = vld [vmem:[#allocation9 + $0x18] sm:$0xf]
    %v1599 = vld [vmem:[#allocation9 + $0x1c] sm:$0xf]
    %v1600 = vld [vmem:[#allocation9 + $0x20] sm:$0xf]
    %v1601 = vld [vmem:[#allocation9 + $0x24] sm:$0xf]
    %v1602 = vld [vmem:[#allocation9 + $0x28] sm:$0xf]
    %v1603 = vld [vmem:[#allocation9 + $0x2c] sm:$0xf]
    %v1604 = vld [vmem:[#allocation9 + $0x30] sm:$0xf]
    %v1605 = vld [vmem:[#allocation9 + $0x34] sm:$0xf]
    %v1606 = vld [vmem:[#allocation9 + $0x38] sm:$0xf]
    %v1607 = vld [vmem:[#allocation9 + $0x3c] sm:$0xf]
    %v1624 = vunpack.c.l.b16 %v1592
    %v1625 = vunpack.c.l.b16 %v1593
    %v1626 = vunpack.c.l.b16 %v1594
    %v1627 = vunpack.c.l.b16 %v1595
    %v1628 = vunpack.c.l.b16 %v1596
    %v1629 = vunpack.c.l.b16 %v1597
    %v1630 = vunpack.c.l.b16 %v1598
    %v1631 = vunpack.c.l.b16 %v1599
    %v1632 = vunpack.c.l.b16 %v1600
    %v1633 = vunpack.c.l.b16 %v1601
    %v1634 = vunpack.c.l.b16 %v1602
    %v1635 = vunpack.c.l.b16 %v1603
    %v1636 = vunpack.c.l.b16 %v1604
    %v1637 = vunpack.c.l.b16 %v1605
    %v1638 = vunpack.c.l.b16 %v1606
    %v1639 = vunpack.c.l.b16 %v1607
    %v1640 = vpack.c.b16 %v1625, %v1624
    %v1641 = vpack.c.b16 %v1627, %v1626
    %v1642 = vpack.c.b16 %v1629, %v1628
    %v1643 = vpack.c.b16 %v1631, %v1630
    %v1644 = vpack.c.b16 %v1633, %v1632
    %v1645 = vpack.c.b16 %v1635, %v1634
    %v1646 = vpack.c.b16 %v1637, %v1636
    %v1647 = vpack.c.b16 %v1639, %v1638
    %1656 = vmatprep.subr.bf16.mxu0 0
    %1657 = vmatpush1.bf16.msra.mxu0 %v1647
    %1658 = vmatprep.subr.bf16.mxu0 0
    %1659 = vmatpush1.bf16.msra.mxu0 %v1646
    %1660 = vmatprep.subr.bf16.mxu0 0
    %1661 = vmatpush1.bf16.msra.mxu0 %v1645
    %1662 = vmatprep.subr.bf16.mxu0 0
    %1663 = vmatpush1.bf16.msra.mxu0 %v1644
    %1664 = vmatprep.subr.bf16.mxu0 0
    %1665 = vmatpush1.bf16.msra.mxu0 %v1643
    %1666 = vmatprep.subr.bf16.mxu0 0
    %1667 = vmatpush1.bf16.msra.mxu0 %v1642
    %1668 = vmatprep.subr.bf16.mxu0 0
    %1669 = vmatpush1.bf16.msra.mxu0 %v1641
    %1670 = vmatprep.subr.bf16.mxu0 0
    %1671 = vmatpush1.bf16.msra.mxu0 %v1640
    %1672 = vmatprep.subr.bf16.mxu0 0
    %1673 = vmatpush2.bf16.msra.mxu0 0
    %1674 = vmatprep.subr.bf16.mxu0 0
    %1675 = vmatpush2.bf16.msra.mxu0 0
    %1676 = vmatprep.subr.bf16.mxu0 0
    %1677 = vmatpush2.bf16.msra.mxu0 0
    %1678 = vmatprep.subr.bf16.mxu0 0
    %1679 = vmatpush2.bf16.msra.mxu0 0
    %1680 = vmatprep.subr.bf16.mxu0 0
    %1681 = vmatpush2.bf16.msra.mxu0 0
    %1682 = vmatprep.subr.bf16.mxu0 0
    %1683 = vmatpush2.bf16.msra.mxu0 0
    %1684 = vmatprep.subr.bf16.mxu0 0
    %1685 = vmatpush2.bf16.msra.mxu0 0
    %1686 = vmatprep.subr.bf16.mxu0 0
    %1687 = vmatpush2.bf16.msra.mxu0 0
    %1688 = vmatprep.mubr.bf16.mxu0 0
    %1689 = vmatmul.mubr.bf16.gmra.mxu0 %v1591
    %v1690 = vpop.f32.mrf.mxu0
    %v1691 = vadd.f32 0.0, %v1690
    %v1692 = vpop.f32.mrf.mxu0
    %v1693 = vpop.f32.mrf.mxu0
    %v1694 = vpop.f32.mrf.mxu0
    %1695 = vdwg.mxu0
    %v1696 = vadd.f32 %v1437, %v1691
    %v1697 = vtanh.pop %v1696
    %v1698 = vsub.f32 %v1429, %v1697
    %v1699 = vmul.f32 %v1587, %v1698
    %v1700 = vadd.f32 %v1697, %v1699
    %s1701 = scalar_lea.vmem [#allocation11], 40
    %1702 = vst [vmem:[%s1701] sm:$0xff] %v1700
    %s1703 = scalar_lea.vmem [#allocation3], 72
    %v1704 = vld [vmem:[%s1703] sm:$0xff]
    %v1705 = vld [vmem:[%s1703 + $0x8] sm:$0xf]
    %v1706 = vunpack.c.l.bf16 %v1704
    %v1707 = vunpack.c.h.bf16 %v1704
    %v1708 = vunpack.c.l.bf16 %v1705
    %v1709 = vpack.c.bf16 %v1700, %v1700
    %v1710 = vld [vmem:[#allocation8] sm:$0xff]
    %v1711 = vld [vmem:[#allocation8 + $0x8] sm:$0xff]
    %v1712 = vld [vmem:[#allocation8 + $0x10] sm:$0xff]
    %v1713 = vld [vmem:[#allocation8 + $0x18] sm:$0xff]
    %v1714 = vld [vmem:[#allocation8 + $0x20] sm:$0xff]
    %v1715 = vld [vmem:[#allocation8 + $0x28] sm:$0xff]
    %v1716 = vld [vmem:[#allocation8 + $0x30] sm:$0xff]
    %v1717 = vld [vmem:[#allocation8 + $0x38] sm:$0xff]
    %v1718 = vld [vmem:[#allocation8 + $0x40] sm:$0xff]
    %v1719 = vld [vmem:[#allocation8 + $0x48] sm:$0xff]
    %v1720 = vld [vmem:[#allocation8 + $0x50] sm:$0xff]
    %v1721 = vld [vmem:[#allocation8 + $0x58] sm:$0xff]
    %v1722 = vld [vmem:[#allocation8 + $0x60] sm:$0xff]
    %v1723 = vld [vmem:[#allocation8 + $0x68] sm:$0xff]
    %v1724 = vld [vmem:[#allocation8 + $0x70] sm:$0xff]
    %v1725 = vld [vmem:[#allocation8 + $0x78] sm:$0xff]
    %v1742 = vunpack.c.l.b16 %v1710
    %v1743 = vunpack.c.h.b16 %v1710
    %v1744 = vunpack.c.l.b16 %v1711
    %v1745 = vunpack.c.h.b16 %v1711
    %v1746 = vunpack.c.l.b16 %v1712
    %v1747 = vunpack.c.h.b16 %v1712
    %v1748 = vunpack.c.l.b16 %v1713
    %v1749 = vunpack.c.h.b16 %v1713
    %v1750 = vunpack.c.l.b16 %v1714
    %v1751 = vunpack.c.h.b16 %v1714
    %v1752 = vunpack.c.l.b16 %v1715
    %v1753 = vunpack.c.h.b16 %v1715
    %v1754 = vunpack.c.l.b16 %v1716
    %v1755 = vunpack.c.h.b16 %v1716
    %v1756 = vunpack.c.l.b16 %v1717
    %v1757 = vunpack.c.h.b16 %v1717
    %v1758 = vunpack.c.l.b16 %v1718
    %v1759 = vunpack.c.h.b16 %v1718
    %v1760 = vunpack.c.l.b16 %v1719
    %v1761 = vunpack.c.h.b16 %v1719
    %v1762 = vunpack.c.l.b16 %v1720
    %v1763 = vunpack.c.h.b16 %v1720
    %v1764 = vunpack.c.l.b16 %v1721
    %v1765 = vunpack.c.h.b16 %v1721
    %v1766 = vunpack.c.l.b16 %v1722
    %v1767 = vunpack.c.h.b16 %v1722
    %v1768 = vunpack.c.l.b16 %v1723
    %v1769 = vunpack.c.h.b16 %v1723
    %v1770 = vunpack.c.l.b16 %v1724
    %v1771 = vunpack.c.h.b16 %v1724
    %v1772 = vunpack.c.l.b16 %v1725
    %v1773 = vunpack.c.h.b16 %v1725
    %v1774 = vpack.c.b16 %v1744, %v1742
    %v1775 = vpack.c.b16 %v1745, %v1743
    %v1776 = vpack.c.b16 %v1748, %v1746
    %v1777 = vpack.c.b16 %v1749, %v1747
    %v1778 = vpack.c.b16 %v1752, %v1750
    %v1779 = vpack.c.b16 %v1753, %v1751
    %v1780 = vpack.c.b16 %v1756, %v1754
    %v1781 = vpack.c.b16 %v1757, %v1755
    %v1782 = vpack.c.b16 %v1760, %v1758
    %v1783 = vpack.c.b16 %v1761, %v1759
    %v1784 = vpack.c.b16 %v1764, %v1762
    %v1785 = vpack.c.b16 %v1765, %v1763
    %v1786 = vpack.c.b16 %v1768, %v1766
    %v1787 = vpack.c.b16 %v1769, %v1767
    %v1788 = vpack.c.b16 %v1772, %v1770
    %v1789 = vpack.c.b16 %v1773, %v1771
    %1806 = vmatprep.subr.bf16.mxu0 %v1789
    %1807 = vmatpush1.bf16.msra.mxu0 %v1788
    %1808 = vmatprep.subr.bf16.mxu0 %v1787
    %1809 = vmatpush1.bf16.msra.mxu0 %v1786
    %1810 = vmatprep.subr.bf16.mxu0 %v1785
    %1811 = vmatpush1.bf16.msra.mxu0 %v1784
    %1812 = vmatprep.subr.bf16.mxu0 %v1783
    %1813 = vmatpush1.bf16.msra.mxu0 %v1782
    %1814 = vmatprep.subr.bf16.mxu0 %v1781
    %1815 = vmatpush1.bf16.msra.mxu0 %v1780
    %1816 = vmatprep.subr.bf16.mxu0 %v1779
    %1817 = vmatpush1.bf16.msra.mxu0 %v1778
    %1818 = vmatprep.subr.bf16.mxu0 %v1777
    %1819 = vmatpush1.bf16.msra.mxu0 %v1776
    %1820 = vmatprep.subr.bf16.mxu0 %v1775
    %1821 = vmatpush1.bf16.msra.mxu0 %v1774
    %1822 = vmatprep.subr.bf16.mxu0 0
    %1823 = vmatpush2.bf16.msra.mxu0 0
    %1824 = vmatprep.subr.bf16.mxu0 0
    %1825 = vmatpush2.bf16.msra.mxu0 0
    %1826 = vmatprep.subr.bf16.mxu0 0
    %1827 = vmatpush2.bf16.msra.mxu0 0
    %1828 = vmatprep.subr.bf16.mxu0 0
    %1829 = vmatpush2.bf16.msra.mxu0 0
    %1830 = vmatprep.subr.bf16.mxu0 0
    %1831 = vmatpush2.bf16.msra.mxu0 0
    %1832 = vmatprep.subr.bf16.mxu0 0
    %1833 = vmatpush2.bf16.msra.mxu0 0
    %1834 = vmatprep.subr.bf16.mxu0 0
    %1835 = vmatpush2.bf16.msra.mxu0 0
    %1836 = vmatprep.subr.bf16.mxu0 0
    %1837 = vmatpush2.bf16.msra.mxu0 0
    %1838 = vmatprep.mubr.bf16.mxu0 0
    %1839 = vmatmul.mubr.bf16.gmra.mxu0 %v1709
    %v1840 = vpop.f32.mrf.mxu0
    %v1841 = vadd.f32 0.0, %v1840
    %v1842 = vpop.f32.mrf.mxu0
    %v1843 = vadd.f32 0.0, %v1842
    %v1844 = vpop.f32.mrf.mxu0
    %v1845 = vpop.f32.mrf.mxu0
    %1846 = vdwg.mxu0
    %v1847 = vadd.f32 %v1706, %v1841
    %v1848 = vadd.f32 %v1707, %v1843
    %v1849 = vxor.u32 %v1847, 2147483648
    %v1850 = vxor.u32 %v1848, 2147483648
    %v1851 = vmul.f32 %v1849, 1.442695
    %v1852 = vpow.pop %v1851
    %v1853 = vmul.f32 %v1850, 1.442695
    %v1854 = vpow.pop %v1853
    %v1855 = vadd.f32 %v1852, 1.0
    %v1856 = vadd.f32 %v1854, 1.0
    %v1857 = vrcp.pop %v1855
    %v1858 = vmul.f32 1.0, %v1857
    %v1859 = vrcp.pop %v1856
    %v1860 = vmul.f32 1.0, %v1859
    %v1861 = vmul.f32 %v1860, %v1700
    %v1862 = vpack.c.bf16 %v1861, %v1861
    %v1863 = vld [vmem:[#allocation9] sm:$0xf]
    %v1864 = vld [vmem:[#allocation9 + $0x4] sm:$0xf]
    %v1865 = vld [vmem:[#allocation9 + $0x8] sm:$0xf]
    %v1866 = vld [vmem:[#allocation9 + $0xc] sm:$0xf]
    %v1867 = vld [vmem:[#allocation9 + $0x10] sm:$0xf]
    %v1868 = vld [vmem:[#allocation9 + $0x14] sm:$0xf]
    %v1869 = vld [vmem:[#allocation9 + $0x18] sm:$0xf]
    %v1870 = vld [vmem:[#allocation9 + $0x1c] sm:$0xf]
    %v1871 = vld [vmem:[#allocation9 + $0x20] sm:$0xf]
    %v1872 = vld [vmem:[#allocation9 + $0x24] sm:$0xf]
    %v1873 = vld [vmem:[#allocation9 + $0x28] sm:$0xf]
    %v1874 = vld [vmem:[#allocation9 + $0x2c] sm:$0xf]
    %v1875 = vld [vmem:[#allocation9 + $0x30] sm:$0xf]
    %v1876 = vld [vmem:[#allocation9 + $0x34] sm:$0xf]
    %v1877 = vld [vmem:[#allocation9 + $0x38] sm:$0xf]
    %v1878 = vld [vmem:[#allocation9 + $0x3c] sm:$0xf]
    %v1895 = vunpack.c.l.b16 %v1863
    %v1896 = vunpack.c.l.b16 %v1864
    %v1897 = vunpack.c.l.b16 %v1865
    %v1898 = vunpack.c.l.b16 %v1866
    %v1899 = vunpack.c.l.b16 %v1867
    %v1900 = vunpack.c.l.b16 %v1868
    %v1901 = vunpack.c.l.b16 %v1869
    %v1902 = vunpack.c.l.b16 %v1870
    %v1903 = vunpack.c.l.b16 %v1871
    %v1904 = vunpack.c.l.b16 %v1872
    %v1905 = vunpack.c.l.b16 %v1873
    %v1906 = vunpack.c.l.b16 %v1874
    %v1907 = vunpack.c.l.b16 %v1875
    %v1908 = vunpack.c.l.b16 %v1876
    %v1909 = vunpack.c.l.b16 %v1877
    %v1910 = vunpack.c.l.b16 %v1878
    %v1911 = vpack.c.b16 %v1896, %v1895
    %v1912 = vpack.c.b16 %v1898, %v1897
    %v1913 = vpack.c.b16 %v1900, %v1899
    %v1914 = vpack.c.b16 %v1902, %v1901
    %v1915 = vpack.c.b16 %v1904, %v1903
    %v1916 = vpack.c.b16 %v1906, %v1905
    %v1917 = vpack.c.b16 %v1908, %v1907
    %v1918 = vpack.c.b16 %v1910, %v1909
    %1927 = vmatprep.subr.bf16.mxu0 0
    %1928 = vmatpush1.bf16.msra.mxu0 %v1918
    %1929 = vmatprep.subr.bf16.mxu0 0
    %1930 = vmatpush1.bf16.msra.mxu0 %v1917
    %1931 = vmatprep.subr.bf16.mxu0 0
    %1932 = vmatpush1.bf16.msra.mxu0 %v1916
    %1933 = vmatprep.subr.bf16.mxu0 0
    %1934 = vmatpush1.bf16.msra.mxu0 %v1915
    %1935 = vmatprep.subr.bf16.mxu0 0
    %1936 = vmatpush1.bf16.msra.mxu0 %v1914
    %1937 = vmatprep.subr.bf16.mxu0 0
    %1938 = vmatpush1.bf16.msra.mxu0 %v1913
    %1939 = vmatprep.subr.bf16.mxu0 0
    %1940 = vmatpush1.bf16.msra.mxu0 %v1912
    %1941 = vmatprep.subr.bf16.mxu0 0
    %1942 = vmatpush1.bf16.msra.mxu0 %v1911
    %1943 = vmatprep.subr.bf16.mxu0 0
    %1944 = vmatpush2.bf16.msra.mxu0 0
    %1945 = vmatprep.subr.bf16.mxu0 0
    %1946 = vmatpush2.bf16.msra.mxu0 0
    %1947 = vmatprep.subr.bf16.mxu0 0
    %1948 = vmatpush2.bf16.msra.mxu0 0
    %1949 = vmatprep.subr.bf16.mxu0 0
    %1950 = vmatpush2.bf16.msra.mxu0 0
    %1951 = vmatprep.subr.bf16.mxu0 0
    %1952 = vmatpush2.bf16.msra.mxu0 0
    %1953 = vmatprep.subr.bf16.mxu0 0
    %1954 = vmatpush2.bf16.msra.mxu0 0
    %1955 = vmatprep.subr.bf16.mxu0 0
    %1956 = vmatpush2.bf16.msra.mxu0 0
    %1957 = vmatprep.subr.bf16.mxu0 0
    %1958 = vmatpush2.bf16.msra.mxu0 0
    %1959 = vmatprep.mubr.bf16.mxu0 0
    %1960 = vmatmul.mubr.bf16.gmra.mxu0 %v1862
    %v1961 = vpop.f32.mrf.mxu0
    %v1962 = vadd.f32 0.0, %v1961
    %v1963 = vpop.f32.mrf.mxu0
    %v1964 = vpop.f32.mrf.mxu0
    %v1965 = vpop.f32.mrf.mxu0
    %1966 = vdwg.mxu0
    %v1967 = vadd.f32 %v1708, %v1962
    %v1968 = vtanh.pop %v1967
    %v1969 = vsub.f32 %v1700, %v1968
    %v1970 = vmul.f32 %v1858, %v1969
    %v1971 = vadd.f32 %v1968, %v1970
    %s1972 = scalar_lea.vmem [#allocation11], 48
    %1973 = vst [vmem:[%s1972] sm:$0xff] %v1971
    %s1974 = scalar_lea.vmem [#allocation3], 84
    %v1975 = vld [vmem:[%s1974] sm:$0xff]
    %v1976 = vld [vmem:[%s1974 + $0x8] sm:$0xf]
    %v1977 = vunpack.c.l.bf16 %v1975
    %v1978 = vunpack.c.h.bf16 %v1975
    %v1979 = vunpack.c.l.bf16 %v1976
    %v1980 = vpack.c.bf16 %v1971, %v1971
    %v1981 = vld [vmem:[#allocation8] sm:$0xff]
    %v1982 = vld [vmem:[#allocation8 + $0x8] sm:$0xff]
    %v1983 = vld [vmem:[#allocation8 + $0x10] sm:$0xff]
    %v1984 = vld [vmem:[#allocation8 + $0x18] sm:$0xff]
    %v1985 = vld [vmem:[#allocation8 + $0x20] sm:$0xff]
    %v1986 = vld [vmem:[#allocation8 + $0x28] sm:$0xff]
    %v1987 = vld [vmem:[#allocation8 + $0x30] sm:$0xff]
    %v1988 = vld [vmem:[#allocation8 + $0x38] sm:$0xff]
    %v1989 = vld [vmem:[#allocation8 + $0x40] sm:$0xff]
    %v1990 = vld [vmem:[#allocation8 + $0x48] sm:$0xff]
    %v1991 = vld [vmem:[#allocation8 + $0x50] sm:$0xff]
    %v1992 = vld [vmem:[#allocation8 + $0x58] sm:$0xff]
    %v1993 = vld [vmem:[#allocation8 + $0x60] sm:$0xff]
    %v1994 = vld [vmem:[#allocation8 + $0x68] sm:$0xff]
    %v1995 = vld [vmem:[#allocation8 + $0x70] sm:$0xff]
    %v1996 = vld [vmem:[#allocation8 + $0x78] sm:$0xff]
    %v2013 = vunpack.c.l.b16 %v1981
    %v2014 = vunpack.c.h.b16 %v1981
    %v2015 = vunpack.c.l.b16 %v1982
    %v2016 = vunpack.c.h.b16 %v1982
    %v2017 = vunpack.c.l.b16 %v1983
    %v2018 = vunpack.c.h.b16 %v1983
    %v2019 = vunpack.c.l.b16 %v1984
    %v2020 = vunpack.c.h.b16 %v1984
    %v2021 = vunpack.c.l.b16 %v1985
    %v2022 = vunpack.c.h.b16 %v1985
    %v2023 = vunpack.c.l.b16 %v1986
    %v2024 = vunpack.c.h.b16 %v1986
    %v2025 = vunpack.c.l.b16 %v1987
    %v2026 = vunpack.c.h.b16 %v1987
    %v2027 = vunpack.c.l.b16 %v1988
    %v2028 = vunpack.c.h.b16 %v1988
    %v2029 = vunpack.c.l.b16 %v1989
    %v2030 = vunpack.c.h.b16 %v1989
    %v2031 = vunpack.c.l.b16 %v1990
    %v2032 = vunpack.c.h.b16 %v1990
    %v2033 = vunpack.c.l.b16 %v1991
    %v2034 = vunpack.c.h.b16 %v1991
    %v2035 = vunpack.c.l.b16 %v1992
    %v2036 = vunpack.c.h.b16 %v1992
    %v2037 = vunpack.c.l.b16 %v1993
    %v2038 = vunpack.c.h.b16 %v1993
    %v2039 = vunpack.c.l.b16 %v1994
    %v2040 = vunpack.c.h.b16 %v1994
    %v2041 = vunpack.c.l.b16 %v1995
    %v2042 = vunpack.c.h.b16 %v1995
    %v2043 = vunpack.c.l.b16 %v1996
    %v2044 = vunpack.c.h.b16 %v1996
    %v2045 = vpack.c.b16 %v2015, %v2013
    %v2046 = vpack.c.b16 %v2016, %v2014
    %v2047 = vpack.c.b16 %v2019, %v2017
    %v2048 = vpack.c.b16 %v2020, %v2018
    %v2049 = vpack.c.b16 %v2023, %v2021
    %v2050 = vpack.c.b16 %v2024, %v2022
    %v2051 = vpack.c.b16 %v2027, %v2025
    %v2052 = vpack.c.b16 %v2028, %v2026
    %v2053 = vpack.c.b16 %v2031, %v2029
    %v2054 = vpack.c.b16 %v2032, %v2030
    %v2055 = vpack.c.b16 %v2035, %v2033
    %v2056 = vpack.c.b16 %v2036, %v2034
    %v2057 = vpack.c.b16 %v2039, %v2037
    %v2058 = vpack.c.b16 %v2040, %v2038
    %v2059 = vpack.c.b16 %v2043, %v2041
    %v2060 = vpack.c.b16 %v2044, %v2042
    %2077 = vmatprep.subr.bf16.mxu0 %v2060
    %2078 = vmatpush1.bf16.msra.mxu0 %v2059
    %2079 = vmatprep.subr.bf16.mxu0 %v2058
    %2080 = vmatpush1.bf16.msra.mxu0 %v2057
    %2081 = vmatprep.subr.bf16.mxu0 %v2056
    %2082 = vmatpush1.bf16.msra.mxu0 %v2055
    %2083 = vmatprep.subr.bf16.mxu0 %v2054
    %2084 = vmatpush1.bf16.msra.mxu0 %v2053
    %2085 = vmatprep.subr.bf16.mxu0 %v2052
    %2086 = vmatpush1.bf16.msra.mxu0 %v2051
    %2087 = vmatprep.subr.bf16.mxu0 %v2050
    %2088 = vmatpush1.bf16.msra.mxu0 %v2049
    %2089 = vmatprep.subr.bf16.mxu0 %v2048
    %2090 = vmatpush1.bf16.msra.mxu0 %v2047
    %2091 = vmatprep.subr.bf16.mxu0 %v2046
    %2092 = vmatpush1.bf16.msra.mxu0 %v2045
    %2093 = vmatprep.subr.bf16.mxu0 0
    %2094 = vmatpush2.bf16.msra.mxu0 0
    %2095 = vmatprep.subr.bf16.mxu0 0
    %2096 = vmatpush2.bf16.msra.mxu0 0
    %2097 = vmatprep.subr.bf16.mxu0 0
    %2098 = vmatpush2.bf16.msra.mxu0 0
    %2099 = vmatprep.subr.bf16.mxu0 0
    %2100 = vmatpush2.bf16.msra.mxu0 0
    %2101 = vmatprep.subr.bf16.mxu0 0
    %2102 = vmatpush2.bf16.msra.mxu0 0
    %2103 = vmatprep.subr.bf16.mxu0 0
    %2104 = vmatpush2.bf16.msra.mxu0 0
    %2105 = vmatprep.subr.bf16.mxu0 0
    %2106 = vmatpush2.bf16.msra.mxu0 0
    %2107 = vmatprep.subr.bf16.mxu0 0
    %2108 = vmatpush2.bf16.msra.mxu0 0
    %2109 = vmatprep.mubr.bf16.mxu0 0
    %2110 = vmatmul.mubr.bf16.gmra.mxu0 %v1980
    %v2111 = vpop.f32.mrf.mxu0
    %v2112 = vadd.f32 0.0, %v2111
    %v2113 = vpop.f32.mrf.mxu0
    %v2114 = vadd.f32 0.0, %v2113
    %v2115 = vpop.f32.mrf.mxu0
    %v2116 = vpop.f32.mrf.mxu0
    %2117 = vdwg.mxu0
    %v2118 = vadd.f32 %v1977, %v2112
    %v2119 = vadd.f32 %v1978, %v2114
    %v2120 = vxor.u32 %v2118, 2147483648
    %v2121 = vxor.u32 %v2119, 2147483648
    %v2122 = vmul.f32 %v2120, 1.442695
    %v2123 = vpow.pop %v2122
    %v2124 = vmul.f32 %v2121, 1.442695
    %v2125 = vpow.pop %v2124
    %v2126 = vadd.f32 %v2123, 1.0
    %v2127 = vadd.f32 %v2125, 1.0
    %v2128 = vrcp.pop %v2126
    %v2129 = vmul.f32 1.0, %v2128
    %v2130 = vrcp.pop %v2127
    %v2131 = vmul.f32 1.0, %v2130
    %v2132 = vmul.f32 %v2131, %v1971
    %v2133 = vpack.c.bf16 %v2132, %v2132
    %v2134 = vld [vmem:[#allocation9] sm:$0xf]
    %v2135 = vld [vmem:[#allocation9 + $0x4] sm:$0xf]
    %v2136 = vld [vmem:[#allocation9 + $0x8] sm:$0xf]
    %v2137 = vld [vmem:[#allocation9 + $0xc] sm:$0xf]
    %v2138 = vld [vmem:[#allocation9 + $0x10] sm:$0xf]
    %v2139 = vld [vmem:[#allocation9 + $0x14] sm:$0xf]
    %v2140 = vld [vmem:[#allocation9 + $0x18] sm:$0xf]
    %v2141 = vld [vmem:[#allocation9 + $0x1c] sm:$0xf]
    %v2142 = vld [vmem:[#allocation9 + $0x20] sm:$0xf]
    %v2143 = vld [vmem:[#allocation9 + $0x24] sm:$0xf]
    %v2144 = vld [vmem:[#allocation9 + $0x28] sm:$0xf]
    %v2145 = vld [vmem:[#allocation9 + $0x2c] sm:$0xf]
    %v2146 = vld [vmem:[#allocation9 + $0x30] sm:$0xf]
    %v2147 = vld [vmem:[#allocation9 + $0x34] sm:$0xf]
    %v2148 = vld [vmem:[#allocation9 + $0x38] sm:$0xf]
    %v2149 = vld [vmem:[#allocation9 + $0x3c] sm:$0xf]
    %v2166 = vunpack.c.l.b16 %v2134
    %v2167 = vunpack.c.l.b16 %v2135
    %v2168 = vunpack.c.l.b16 %v2136
    %v2169 = vunpack.c.l.b16 %v2137
    %v2170 = vunpack.c.l.b16 %v2138
    %v2171 = vunpack.c.l.b16 %v2139
    %v2172 = vunpack.c.l.b16 %v2140
    %v2173 = vunpack.c.l.b16 %v2141
    %v2174 = vunpack.c.l.b16 %v2142
    %v2175 = vunpack.c.l.b16 %v2143
    %v2176 = vunpack.c.l.b16 %v2144
    %v2177 = vunpack.c.l.b16 %v2145
    %v2178 = vunpack.c.l.b16 %v2146
    %v2179 = vunpack.c.l.b16 %v2147
    %v2180 = vunpack.c.l.b16 %v2148
    %v2181 = vunpack.c.l.b16 %v2149
    %v2182 = vpack.c.b16 %v2167, %v2166
    %v2183 = vpack.c.b16 %v2169, %v2168
    %v2184 = vpack.c.b16 %v2171, %v2170
    %v2185 = vpack.c.b16 %v2173, %v2172
    %v2186 = vpack.c.b16 %v2175, %v2174
    %v2187 = vpack.c.b16 %v2177, %v2176
    %v2188 = vpack.c.b16 %v2179, %v2178
    %v2189 = vpack.c.b16 %v2181, %v2180
    %2198 = vmatprep.subr.bf16.mxu0 0
    %2199 = vmatpush1.bf16.msra.mxu0 %v2189
    %2200 = vmatprep.subr.bf16.mxu0 0
    %2201 = vmatpush1.bf16.msra.mxu0 %v2188
    %2202 = vmatprep.subr.bf16.mxu0 0
    %2203 = vmatpush1.bf16.msra.mxu0 %v2187
    %2204 = vmatprep.subr.bf16.mxu0 0
    %2205 = vmatpush1.bf16.msra.mxu0 %v2186
    %2206 = vmatprep.subr.bf16.mxu0 0
    %2207 = vmatpush1.bf16.msra.mxu0 %v2185
    %2208 = vmatprep.subr.bf16.mxu0 0
    %2209 = vmatpush1.bf16.msra.mxu0 %v2184
    %2210 = vmatprep.subr.bf16.mxu0 0
    %2211 = vmatpush1.bf16.msra.mxu0 %v2183
    %2212 = vmatprep.subr.bf16.mxu0 0
    %2213 = vmatpush1.bf16.msra.mxu0 %v2182
    %2214 = vmatprep.subr.bf16.mxu0 0
    %2215 = vmatpush2.bf16.msra.mxu0 0
    %2216 = vmatprep.subr.bf16.mxu0 0
    %2217 = vmatpush2.bf16.msra.mxu0 0
    %2218 = vmatprep.subr.bf16.mxu0 0
    %2219 = vmatpush2.bf16.msra.mxu0 0
    %2220 = vmatprep.subr.bf16.mxu0 0
    %2221 = vmatpush2.bf16.msra.mxu0 0
    %2222 = vmatprep.subr.bf16.mxu0 0
    %2223 = vmatpush2.bf16.msra.mxu0 0
    %2224 = vmatprep.subr.bf16.mxu0 0
    %2225 = vmatpush2.bf16.msra.mxu0 0
    %2226 = vmatprep.subr.bf16.mxu0 0
    %2227 = vmatpush2.bf16.msra.mxu0 0
    %2228 = vmatprep.subr.bf16.mxu0 0
    %2229 = vmatpush2.bf16.msra.mxu0 0
    %2230 = vmatprep.mubr.bf16.mxu0 0
    %2231 = vmatmul.mubr.bf16.gmra.mxu0 %v2133
    %v2232 = vpop.f32.mrf.mxu0
    %v2233 = vadd.f32 0.0, %v2232
    %v2234 = vpop.f32.mrf.mxu0
    %v2235 = vpop.f32.mrf.mxu0
    %v2236 = vpop.f32.mrf.mxu0
    %2237 = vdwg.mxu0
    %v2238 = vadd.f32 %v1979, %v2233
    %v2239 = vtanh.pop %v2238
    %v2240 = vsub.f32 %v1971, %v2239
    %v2241 = vmul.f32 %v2129, %v2240
    %v2242 = vadd.f32 %v2239, %v2241
    %s2243 = scalar_lea.vmem [#allocation11], 56
    %2244 = vst [vmem:[%s2243] sm:$0xff] %v2242
    %2245 = vst [vmem:[#allocation2] sm:$0xff] %v2242
    // Predicated region
    $region38: #{tpu_custom_call.1} parent=1 // pred_check
      _
    $region39: #{tpu_custom_call.1} parent=1 // pred_check_branch
      %2247 = sbr.rel (0) target = $region41
    $region40: #{tpu_custom_call.1} parent=1 // pred_region
      %s2249 = ssub.s32 1024, 1024
      %2250 = vsyncadd [#allocation5], %s2249
      %s2251 = sshll.u32 [#allocation11], 4
      %s2252 = int_to_ptr.vmem [resolvable:$true] %s2251
      %2257 = dma.vmem_to_hbm [thread:$0]  %s2252, 1024, %s4, [#allocation5], 128, 128, 8
    $region41: #{tpu_custom_call.1} parent=1 // pred_fallthru
      _
    // Predicated region
    $region42: #{tpu_custom_call.1} parent=1 // pred_check
      _
    $region43: #{tpu_custom_call.1} parent=1 // pred_check_branch
      %2259 = sbr.rel (0) target = $region45
    $region44: #{tpu_custom_call.1} parent=1 // pred_region
      %2260 = dma.done [#allocation5], 1024
    $region45: #{tpu_custom_call.1} parent=1 // pred_fallthru
      _
    %2261 = vsyncpa [#allocation4], 1
    %2262 = vsyncpa [#allocation7], 1
    %2263 = vsyncpa [#allocation10], 1
    %2264 = vsyncpa [#allocation5], 1

</llo_original>
